<compile_context>
chip_gen: v6e
topology: v6e:2x2x1
jax: 0.10.0
libtpu: 0.0.40
codegen_flags: <defaults>
</compile_context>

<pallas_src>
import math
from functools import partial

import jax
import jax.numpy as jnp
from jax.experimental import pallas as pl
from jax.experimental.pallas import tpu as pltpu

F32 = jnp.float32
BF16 = jnp.bfloat16


# ------------------------------ fused kernel --------------------------------

def _mha_kernel(x_ref, t_ref, mask_ref,
                wq_ref, bq_ref, wk_ref, bk_ref, wv_ref, bv_ref,
                wo_ref, bo_ref, g_ref, beta_ref, o_ref,
                *, num_heads, eps):
    Lq, D = x_ref.shape[1], x_ref.shape[2]

    x = x_ref[0]                              # [Lq, D] f32 (also the residual)
    t = t_ref[0]                              # [Lk, D] f32
    xb = x.astype(BF16)                       # bf16 MXU operands
    tb = t.astype(BF16)

    # Additive mask bias from the raw [1, Lk] mask row; stays f32.
    bias = (1.0 - mask_ref[0]) * -100000.0    # [1, Lk], broadcasts over Lq

    acc = jnp.zeros((Lq, D), F32)             # output-projection accumulator
    for h in range(num_heads):
        # Per-head projections; weights were split per head wrapper-side so the
        # only in-kernel indexing is a static leading-axis index (no lane
        # slices). The softmax scale is already folded into wq/bq.
        q = jnp.dot(xb, wq_ref[h], preferred_element_type=F32) + bq_ref[h]   # [Lq, hd]
        k = jnp.dot(tb, wk_ref[h], preferred_element_type=F32) + bk_ref[h]   # [Lk, hd]
        v = jnp.dot(tb, wv_ref[h], preferred_element_type=F32)               # [Lk, hd]

        # q @ k^T without materializing a transpose; mask + softmax in f32.
        s = jax.lax.dot_general(q.astype(BF16), k.astype(BF16),
                                (((1,), (1,)), ((), ())),
                                preferred_element_type=F32)                  # [Lq, Lk]
        s = s + bias
        s = s - jnp.max(s, axis=-1, keepdims=True)
        p = jnp.exp(s)
        denom = jnp.sum(p, axis=-1, keepdims=True)                           # [Lq, 1]

        # Unnormalized p @ v; normalize the small [Lq, hd] result (not the
        # [Lq, Lk] matrix). Softmax rows sum to 1 => value bias adds afterwards.
        o = jnp.dot(p.astype(BF16), v.astype(BF16), preferred_element_type=F32)
        o = o * pl.reciprocal(denom, approx=True) + bv_ref[h]                # [Lq, hd]

        # Accumulate directly into the output projection (no head concat).
        acc = acc + jnp.dot(o.astype(BF16), wo_ref[h], preferred_element_type=F32)

    # Output bias + residual + LayerNorm, fused in the same kernel (all f32).
    y = acc + bo_ref[...] + x
    mu = jnp.mean(y, axis=-1, keepdims=True)
    var = jnp.mean(jnp.square(y - mu), axis=-1, keepdims=True)
    yn = (y - mu) * jax.lax.rsqrt(var + eps)
    o_ref[0] = (yn * g_ref[...] + beta_ref[...]).astype(o_ref.dtype)


def multihead_attention(params, in_features, tgt_features=None, tgt_mask=None, *,
                        num_heads, layer_norm_eps):
    """Fused MultiheadAttention forward (dropout = identity / eval mode)."""
    if tgt_features is None:
        tgt_features = in_features
    B, Lq, D = in_features.shape
    Lk = tgt_features.shape[1]
    H = num_heads
    hd = D // H
    if tgt_mask is None:
        tgt_mask = jnp.ones((B, Lk), F32)
    scale = 1.0 / math.sqrt(hd)

    # Wrapper-side per-head weight splits (free in XLA); bf16 for MXU operands.
    def per_head_in(w):                       # [D, D] -> [H, D, hd]
        return jnp.transpose(w.reshape(D, H, hd), (1, 0, 2))

    wq = (per_head_in(params['wq']) * scale).astype(BF16)
    wk = per_head_in(params['wk']).astype(BF16)
    wv = per_head_in(params['wv']).astype(BF16)
    wo = params['wo'].reshape(H, hd, D).astype(BF16)     # row-split of Wo
    bq = (params['bq'] * scale).reshape(H, 1, hd).astype(F32)
    bk = params['bk'].reshape(H, 1, hd).astype(F32)
    bv = params['bv'].reshape(H, 1, hd).astype(F32)
    bo = params['bo'][None].astype(F32)
    gamma = params['gamma'][None].astype(F32)
    beta = params['beta'][None].astype(F32)
    mask3 = tgt_mask.astype(F32).reshape(B, 1, Lk)

    kernel = partial(_mha_kernel, num_heads=H, eps=layer_norm_eps)
    const3 = lambda b: (0, 0, 0)
    const2 = lambda b: (0, 0)
    return pl.pallas_call(
        kernel,
        out_shape=jax.ShapeDtypeStruct((B, Lq, D), F32),
        grid=(B,),
        in_specs=[
            pl.BlockSpec((1, Lq, D), lambda b: (b, 0, 0)),   # in_features
            pl.BlockSpec((1, Lk, D), lambda b: (b, 0, 0)),   # tgt_features
            pl.BlockSpec((1, 1, Lk), lambda b: (b, 0, 0)),   # mask
            pl.BlockSpec((H, D, hd), const3),                # Wq (scaled, per-head)
            pl.BlockSpec((H, 1, hd), const3),                # bq (scaled)
            pl.BlockSpec((H, D, hd), const3),                # Wk
            pl.BlockSpec((H, 1, hd), const3),                # bk
            pl.BlockSpec((H, D, hd), const3),                # Wv
            pl.BlockSpec((H, 1, hd), const3),                # bv
            pl.BlockSpec((H, hd, D), const3),                # Wo (row-split)
            pl.BlockSpec((1, D), const2),                    # bo
            pl.BlockSpec((1, D), const2),                    # LN gamma
            pl.BlockSpec((1, D), const2),                    # LN beta
        ],
        out_specs=pl.BlockSpec((1, Lq, D), lambda b: (b, 0, 0)),
        compiler_params=pltpu.CompilerParams(
            dimension_semantics=("parallel",),
            vmem_limit_bytes=32 * 1024 * 1024,
        ),
    )(in_features.astype(F32), tgt_features.astype(F32), mask3,
      wq, bq, wk, bk, wv, bv, wo, bo, gamma, beta)


# --------------------------- pure-JAX reference ------------------------------

def _mha_reference(params, x, tgt=None, mask=None, *, num_heads, eps):
    if tgt is None:
        tgt = x
    B, Lq, D = x.shape
    Lk = tgt.shape[1]
    hd = D // num_heads
    q = x @ params['wq'] + params['bq']
    k = tgt @ params['wk'] + params['bk']
    v = tgt @ params['wv'] + params['bv']

    def split(a, L):
        return a.reshape(B, L, num_heads, hd).transpose(0, 2, 1, 3)

    qh, kh, vh = split(q, Lq), split(k, Lk), split(v, Lk)
    s = jnp.einsum('bhqd,bhkd->bhqk', qh, kh) / math.sqrt(hd)
    if mask is not None:
        s = s + (1.0 - mask)[:, None, None, :] * -100000.0
    p = jax.nn.softmax(s, axis=-1)
    ctx = jnp.einsum('bhqk,bhkd->bhqd', p, vh).transpose(0, 2, 1, 3).reshape(B, Lq, D)
    out = ctx @ params['wo'] + params['bo']
    y = out + x
    mu = y.mean(-1, keepdims=True)
    var = jnp.square(y - mu).mean(-1, keepdims=True)
    return (y - mu) / jnp.sqrt(var + eps) * params['gamma'] + params['beta']


# ---------------------------------- main -------------------------------------

if __name__ == "__main__":
    embed_dim, num_heads, eps = 32, 4, 1e-12
    B, L = 2, 16

    key = jax.random.PRNGKey(0)
    ks = jax.random.split(key, 6)

    def dense(kk, fi, fo):
        kw, kb = jax.random.split(kk)
        return (jax.random.normal(kw, (fi, fo), F32) * 0.02,
                jax.random.normal(kb, (fo,), F32) * 0.02)

    wq, bq = dense(ks[0], embed_dim, embed_dim)
    wk, bk = dense(ks[1], embed_dim, embed_dim)
    wv, bv = dense(ks[2], embed_dim, embed_dim)
    wo, bo = dense(ks[3], embed_dim, embed_dim)
    params = dict(wq=wq, bq=bq, wk=wk, bk=bk, wv=wv, bv=bv, wo=wo, bo=bo,
                  gamma=jnp.ones((embed_dim,), F32),
                  beta=jnp.zeros((embed_dim,), F32))

    in_features = jax.random.normal(ks[4], (B, L, embed_dim), F32)
    tgt_mask = jnp.ones((B, L), F32).at[:, -2:].set(0.0)   # mask out last two tokens

    out = multihead_attention(params, in_features, tgt_features=None,
                              tgt_mask=tgt_mask,
                              num_heads=num_heads, layer_norm_eps=eps)
    out = jax.block_until_ready(out)

    assert out.shape == (B, L, embed_dim), out.shape
    assert out.dtype == jnp.float32

    ref = _mha_reference(params, in_features, None, tgt_mask,
                         num_heads=num_heads, eps=eps)
    err = float(jnp.max(jnp.abs(out - ref)))
    assert err < 1e-2, f"max abs err vs reference: {err}"

    print("KERNEL_OK")
</pallas_src>

<mosaic_0001>
module attributes {stable_mosaic.version = 11 : i64} {
  func.func @_mha_kernel(%arg0: i32, %arg1: memref<1x16x32xf32, #tpu.memory_space<vmem>>, %arg2: memref<1x16x32xf32, #tpu.memory_space<vmem>>, %arg3: memref<1x1x16xf32, #tpu.memory_space<vmem>>, %arg4: memref<4x32x8xbf16, #tpu.memory_space<vmem>>, %arg5: memref<4x1x8xf32, #tpu.memory_space<vmem>>, %arg6: memref<4x32x8xbf16, #tpu.memory_space<vmem>>, %arg7: memref<4x1x8xf32, #tpu.memory_space<vmem>>, %arg8: memref<4x32x8xbf16, #tpu.memory_space<vmem>>, %arg9: memref<4x1x8xf32, #tpu.memory_space<vmem>>, %arg10: memref<4x8x32xbf16, #tpu.memory_space<vmem>>, %arg11: memref<1x32xf32, #tpu.memory_space<vmem>>, %arg12: memref<1x32xf32, #tpu.memory_space<vmem>>, %arg13: memref<1x32xf32, #tpu.memory_space<vmem>>, %arg14: memref<1x16x32xf32, #tpu.memory_space<vmem>>) attributes {dimension_semantics = [#tpu.dimension_semantics<parallel>], iteration_bounds = array<i64: 2>, scalar_prefetch = 0 : i64, scratch_operands = 0 : i64, tpu.core_type = #tpu.core_type<tc>, window_params = [{transform_indices = @transform_0, window_bounds = array<i64: 1, 16, 32>}, {transform_indices = @transform_1, window_bounds = array<i64: 1, 16, 32>}, {transform_indices = @transform_2, window_bounds = array<i64: 1, 1, 16>}, {pipeline_mode = #tpu.pipeline_mode<synchronous>, transform_indices = @transform_3, window_bounds = array<i64: 4, 32, 8>}, {pipeline_mode = #tpu.pipeline_mode<synchronous>, transform_indices = @transform_4, window_bounds = array<i64: 4, 1, 8>}, {pipeline_mode = #tpu.pipeline_mode<synchronous>, transform_indices = @transform_5, window_bounds = array<i64: 4, 32, 8>}, {pipeline_mode = #tpu.pipeline_mode<synchronous>, transform_indices = @transform_6, window_bounds = array<i64: 4, 1, 8>}, {pipeline_mode = #tpu.pipeline_mode<synchronous>, transform_indices = @transform_7, window_bounds = array<i64: 4, 32, 8>}, {pipeline_mode = #tpu.pipeline_mode<synchronous>, transform_indices = @transform_8, window_bounds = array<i64: 4, 1, 8>}, {pipeline_mode = #tpu.pipeline_mode<synchronous>, transform_indices = @transform_9, window_bounds = array<i64: 4, 8, 32>}, {pipeline_mode = #tpu.pipeline_mode<synchronous>, transform_indices = @transform_10, window_bounds = array<i64: 1, 32>}, {pipeline_mode = #tpu.pipeline_mode<synchronous>, transform_indices = @transform_11, window_bounds = array<i64: 1, 32>}, {pipeline_mode = #tpu.pipeline_mode<synchronous>, transform_indices = @transform_12, window_bounds = array<i64: 1, 32>}, {transform_indices = @transform_13, window_bounds = array<i64: 1, 16, 32>}]} {
    %c0 = arith.constant 0 : index
    %c0_0 = arith.constant 0 : index
    %c0_1 = arith.constant 0 : index
    %0 = vector.load %arg1[%c0, %c0_0, %c0_1] : memref<1x16x32xf32, #tpu.memory_space<vmem>>, vector<1x16x32xf32>
    %1 = vector.shape_cast %0 : vector<1x16x32xf32> to vector<16x32xf32>
    %c0_2 = arith.constant 0 : index
    %c0_3 = arith.constant 0 : index
    %c0_4 = arith.constant 0 : index
    %2 = vector.load %arg2[%c0_2, %c0_3, %c0_4] : memref<1x16x32xf32, #tpu.memory_space<vmem>>, vector<1x16x32xf32>
    %3 = vector.shape_cast %2 : vector<1x16x32xf32> to vector<16x32xf32>
    %4 = arith.truncf %1 : vector<16x32xf32> to vector<16x32xbf16>
    %5 = arith.truncf %3 : vector<16x32xf32> to vector<16x32xbf16>
    %c0_5 = arith.constant 0 : index
    %c0_6 = arith.constant 0 : index
    %c0_7 = arith.constant 0 : index
    %6 = vector.load %arg3[%c0_5, %c0_6, %c0_7] : memref<1x1x16xf32, #tpu.memory_space<vmem>>, vector<1x1x16xf32>
    %7 = vector.shape_cast %6 : vector<1x1x16xf32> to vector<1x16xf32>
    %cst = arith.constant 1.000000e+00 : f32
    %8 = vector.broadcast %cst : f32 to vector<1x16xf32>
    %9 = arith.subf %8, %7 : vector<1x16xf32>
    %cst_8 = arith.constant -1.000000e+05 : f32
    %10 = vector.broadcast %cst_8 : f32 to vector<1x16xf32>
    %11 = arith.mulf %9, %10 : vector<1x16xf32>
    %cst_9 = arith.constant 0.000000e+00 : f32
    %12 = vector.broadcast %cst_9 : f32 to vector<16x32xf32>
    %c0_10 = arith.constant 0 : index
    %c0_11 = arith.constant 0 : index
    %c0_12 = arith.constant 0 : index
    %13 = vector.load %arg4[%c0_10, %c0_11, %c0_12] : memref<4x32x8xbf16, #tpu.memory_space<vmem>>, vector<1x32x8xbf16>
    %14 = vector.shape_cast %13 : vector<1x32x8xbf16> to vector<32x8xbf16>
    %cst_13 = arith.constant dense<0.000000e+00> : vector<16x8xf32>
    %15 = tpu.matmul %4, %14, %cst_13 {dimension_numbers = #tpu.dot_dimension_numbers<[1], [0], [0], [1], [0, 0, 1, 1], [], []>} : vector<16x32xbf16>, vector<32x8xbf16>, vector<16x8xf32> -> vector<16x8xf32>
    %c0_14 = arith.constant 0 : index
    %c0_15 = arith.constant 0 : index
    %c0_16 = arith.constant 0 : index
    %16 = vector.load %arg5[%c0_14, %c0_15, %c0_16] : memref<4x1x8xf32, #tpu.memory_space<vmem>>, vector<1x1x8xf32>
    %17 = vector.shape_cast %16 : vector<1x1x8xf32> to vector<1x8xf32>
    %18 = vector.broadcast %17 : vector<1x8xf32> to vector<16x8xf32>
    %19 = arith.addf %15, %18 : vector<16x8xf32>
    %c0_17 = arith.constant 0 : index
    %c0_18 = arith.constant 0 : index
    %c0_19 = arith.constant 0 : index
    %20 = vector.load %arg6[%c0_17, %c0_18, %c0_19] : memref<4x32x8xbf16, #tpu.memory_space<vmem>>, vector<1x32x8xbf16>
    %21 = vector.shape_cast %20 : vector<1x32x8xbf16> to vector<32x8xbf16>
    %cst_20 = arith.constant dense<0.000000e+00> : vector<16x8xf32>
    %22 = tpu.matmul %5, %21, %cst_20 {dimension_numbers = #tpu.dot_dimension_numbers<[1], [0], [0], [1], [0, 0, 1, 1], [], []>} : vector<16x32xbf16>, vector<32x8xbf16>, vector<16x8xf32> -> vector<16x8xf32>
    %c0_21 = arith.constant 0 : index
    %c0_22 = arith.constant 0 : index
    %c0_23 = arith.constant 0 : index
    %23 = vector.load %arg7[%c0_21, %c0_22, %c0_23] : memref<4x1x8xf32, #tpu.memory_space<vmem>>, vector<1x1x8xf32>
    %24 = vector.shape_cast %23 : vector<1x1x8xf32> to vector<1x8xf32>
    %25 = vector.broadcast %24 : vector<1x8xf32> to vector<16x8xf32>
    %26 = arith.addf %22, %25 : vector<16x8xf32>
    %c0_24 = arith.constant 0 : index
    %c0_25 = arith.constant 0 : index
    %c0_26 = arith.constant 0 : index
    %27 = vector.load %arg8[%c0_24, %c0_25, %c0_26] : memref<4x32x8xbf16, #tpu.memory_space<vmem>>, vector<1x32x8xbf16>
    %28 = vector.shape_cast %27 : vector<1x32x8xbf16> to vector<32x8xbf16>
    %cst_27 = arith.constant dense<0.000000e+00> : vector<16x8xf32>
    %29 = tpu.matmul %5, %28, %cst_27 {dimension_numbers = #tpu.dot_dimension_numbers<[1], [0], [0], [1], [0, 0, 1, 1], [], []>} : vector<16x32xbf16>, vector<32x8xbf16>, vector<16x8xf32> -> vector<16x8xf32>
    %30 = arith.truncf %19 : vector<16x8xf32> to vector<16x8xbf16>
    %31 = arith.truncf %26 : vector<16x8xf32> to vector<16x8xbf16>
    %cst_28 = arith.constant dense<0.000000e+00> : vector<16x16xf32>
    %32 = tpu.matmul %30, %31, %cst_28 {dimension_numbers = #tpu.dot_dimension_numbers<[1], [1], [0], [0], [0, 0, 1, 0], [], []>} : vector<16x8xbf16>, vector<16x8xbf16>, vector<16x16xf32> -> vector<16x16xf32>
    %33 = vector.broadcast %11 : vector<1x16xf32> to vector<16x16xf32>
    %34 = arith.addf %32, %33 : vector<16x16xf32>
    %cst_29 = arith.constant dense<0xFF800000> : vector<16xf32>
    %35 = vector.multi_reduction <maximumf>, %34, %cst_29 [1] : vector<16x16xf32> to vector<16xf32>
    %36 = vector.shape_cast %35 : vector<16xf32> to vector<16x1xf32>
    %37 = vector.broadcast %36 : vector<16x1xf32> to vector<16x16xf32>
    %38 = arith.subf %34, %37 : vector<16x16xf32>
    %39 = math.exp %38 : vector<16x16xf32>
    %cst_30 = arith.constant dense<0.000000e+00> : vector<16xf32>
    %40 = vector.multi_reduction <add>, %39, %cst_30 [1] : vector<16x16xf32> to vector<16xf32>
    %41 = vector.shape_cast %40 : vector<16xf32> to vector<16x1xf32>
    %42 = arith.truncf %39 : vector<16x16xf32> to vector<16x16xbf16>
    %43 = arith.truncf %29 : vector<16x8xf32> to vector<16x8xbf16>
    %cst_31 = arith.constant dense<0.000000e+00> : vector<16x8xf32>
    %44 = tpu.matmul %42, %43, %cst_31 {dimension_numbers = #tpu.dot_dimension_numbers<[1], [0], [0], [1], [0, 0, 1, 1], [], []>} : vector<16x16xbf16>, vector<16x8xbf16>, vector<16x8xf32> -> vector<16x8xf32>
    %45 = tpu.reciprocal %41 {approx = true} : vector<16x1xf32> -> vector<16x1xf32>
    %46 = vector.broadcast %45 : vector<16x1xf32> to vector<16x8xf32>
    %47 = arith.mulf %44, %46 : vector<16x8xf32>
    %c0_32 = arith.constant 0 : index
    %c0_33 = arith.constant 0 : index
    %c0_34 = arith.constant 0 : index
    %48 = vector.load %arg9[%c0_32, %c0_33, %c0_34] : memref<4x1x8xf32, #tpu.memory_space<vmem>>, vector<1x1x8xf32>
    %49 = vector.shape_cast %48 : vector<1x1x8xf32> to vector<1x8xf32>
    %50 = vector.broadcast %49 : vector<1x8xf32> to vector<16x8xf32>
    %51 = arith.addf %47, %50 : vector<16x8xf32>
    %52 = arith.truncf %51 : vector<16x8xf32> to vector<16x8xbf16>
    %c0_35 = arith.constant 0 : index
    %c0_36 = arith.constant 0 : index
    %c0_37 = arith.constant 0 : index
    %53 = vector.load %arg10[%c0_35, %c0_36, %c0_37] : memref<4x8x32xbf16, #tpu.memory_space<vmem>>, vector<1x8x32xbf16>
    %54 = vector.shape_cast %53 : vector<1x8x32xbf16> to vector<8x32xbf16>
    %cst_38 = arith.constant dense<0.000000e+00> : vector<16x32xf32>
    %55 = tpu.matmul %52, %54, %cst_38 {dimension_numbers = #tpu.dot_dimension_numbers<[1], [0], [0], [1], [0, 0, 1, 1], [], []>} : vector<16x8xbf16>, vector<8x32xbf16>, vector<16x32xf32> -> vector<16x32xf32>
    %56 = arith.addf %12, %55 : vector<16x32xf32>
    %c1 = arith.constant 1 : index
    %c0_39 = arith.constant 0 : index
    %c0_40 = arith.constant 0 : index
    %57 = vector.load %arg4[%c1, %c0_39, %c0_40] : memref<4x32x8xbf16, #tpu.memory_space<vmem>>, vector<1x32x8xbf16>
    %58 = vector.shape_cast %57 : vector<1x32x8xbf16> to vector<32x8xbf16>
    %cst_41 = arith.constant dense<0.000000e+00> : vector<16x8xf32>
    %59 = tpu.matmul %4, %58, %cst_41 {dimension_numbers = #tpu.dot_dimension_numbers<[1], [0], [0], [1], [0, 0, 1, 1], [], []>} : vector<16x32xbf16>, vector<32x8xbf16>, vector<16x8xf32> -> vector<16x8xf32>
    %c1_42 = arith.constant 1 : index
    %c0_43 = arith.constant 0 : index
    %c0_44 = arith.constant 0 : index
    %60 = vector.load %arg5[%c1_42, %c0_43, %c0_44] : memref<4x1x8xf32, #tpu.memory_space<vmem>>, vector<1x1x8xf32>
    %61 = vector.shape_cast %60 : vector<1x1x8xf32> to vector<1x8xf32>
    %62 = vector.broadcast %61 : vector<1x8xf32> to vector<16x8xf32>
    %63 = arith.addf %59, %62 : vector<16x8xf32>
    %c1_45 = arith.constant 1 : index
    %c0_46 = arith.constant 0 : index
    %c0_47 = arith.constant 0 : index
    %64 = vector.load %arg6[%c1_45, %c0_46, %c0_47] : memref<4x32x8xbf16, #tpu.memory_space<vmem>>, vector<1x32x8xbf16>
    %65 = vector.shape_cast %64 : vector<1x32x8xbf16> to vector<32x8xbf16>
    %cst_48 = arith.constant dense<0.000000e+00> : vector<16x8xf32>
    %66 = tpu.matmul %5, %65, %cst_48 {dimension_numbers = #tpu.dot_dimension_numbers<[1], [0], [0], [1], [0, 0, 1, 1], [], []>} : vector<16x32xbf16>, vector<32x8xbf16>, vector<16x8xf32> -> vector<16x8xf32>
    %c1_49 = arith.constant 1 : index
    %c0_50 = arith.constant 0 : index
    %c0_51 = arith.constant 0 : index
    %67 = vector.load %arg7[%c1_49, %c0_50, %c0_51] : memref<4x1x8xf32, #tpu.memory_space<vmem>>, vector<1x1x8xf32>
    %68 = vector.shape_cast %67 : vector<1x1x8xf32> to vector<1x8xf32>
    %69 = vector.broadcast %68 : vector<1x8xf32> to vector<16x8xf32>
    %70 = arith.addf %66, %69 : vector<16x8xf32>
    %c1_52 = arith.constant 1 : index
    %c0_53 = arith.constant 0 : index
    %c0_54 = arith.constant 0 : index
    %71 = vector.load %arg8[%c1_52, %c0_53, %c0_54] : memref<4x32x8xbf16, #tpu.memory_space<vmem>>, vector<1x32x8xbf16>
    %72 = vector.shape_cast %71 : vector<1x32x8xbf16> to vector<32x8xbf16>
    %cst_55 = arith.constant dense<0.000000e+00> : vector<16x8xf32>
    %73 = tpu.matmul %5, %72, %cst_55 {dimension_numbers = #tpu.dot_dimension_numbers<[1], [0], [0], [1], [0, 0, 1, 1], [], []>} : vector<16x32xbf16>, vector<32x8xbf16>, vector<16x8xf32> -> vector<16x8xf32>
    %74 = arith.truncf %63 : vector<16x8xf32> to vector<16x8xbf16>
    %75 = arith.truncf %70 : vector<16x8xf32> to vector<16x8xbf16>
    %cst_56 = arith.constant dense<0.000000e+00> : vector<16x16xf32>
    %76 = tpu.matmul %74, %75, %cst_56 {dimension_numbers = #tpu.dot_dimension_numbers<[1], [1], [0], [0], [0, 0, 1, 0], [], []>} : vector<16x8xbf16>, vector<16x8xbf16>, vector<16x16xf32> -> vector<16x16xf32>
    %77 = vector.broadcast %11 : vector<1x16xf32> to vector<16x16xf32>
    %78 = arith.addf %76, %77 : vector<16x16xf32>
    %cst_57 = arith.constant dense<0xFF800000> : vector<16xf32>
    %79 = vector.multi_reduction <maximumf>, %78, %cst_57 [1] : vector<16x16xf32> to vector<16xf32>
    %80 = vector.shape_cast %79 : vector<16xf32> to vector<16x1xf32>
    %81 = vector.broadcast %80 : vector<16x1xf32> to vector<16x16xf32>
    %82 = arith.subf %78, %81 : vector<16x16xf32>
    %83 = math.exp %82 : vector<16x16xf32>
    %cst_58 = arith.constant dense<0.000000e+00> : vector<16xf32>
    %84 = vector.multi_reduction <add>, %83, %cst_58 [1] : vector<16x16xf32> to vector<16xf32>
    %85 = vector.shape_cast %84 : vector<16xf32> to vector<16x1xf32>
    %86 = arith.truncf %83 : vector<16x16xf32> to vector<16x16xbf16>
    %87 = arith.truncf %73 : vector<16x8xf32> to vector<16x8xbf16>
    %cst_59 = arith.constant dense<0.000000e+00> : vector<16x8xf32>
    %88 = tpu.matmul %86, %87, %cst_59 {dimension_numbers = #tpu.dot_dimension_numbers<[1], [0], [0], [1], [0, 0, 1, 1], [], []>} : vector<16x16xbf16>, vector<16x8xbf16>, vector<16x8xf32> -> vector<16x8xf32>
    %89 = tpu.reciprocal %85 {approx = true} : vector<16x1xf32> -> vector<16x1xf32>
    %90 = vector.broadcast %89 : vector<16x1xf32> to vector<16x8xf32>
    %91 = arith.mulf %88, %90 : vector<16x8xf32>
    %c1_60 = arith.constant 1 : index
    %c0_61 = arith.constant 0 : index
    %c0_62 = arith.constant 0 : index
    %92 = vector.load %arg9[%c1_60, %c0_61, %c0_62] : memref<4x1x8xf32, #tpu.memory_space<vmem>>, vector<1x1x8xf32>
    %93 = vector.shape_cast %92 : vector<1x1x8xf32> to vector<1x8xf32>
    %94 = vector.broadcast %93 : vector<1x8xf32> to vector<16x8xf32>
    %95 = arith.addf %91, %94 : vector<16x8xf32>
    %96 = arith.truncf %95 : vector<16x8xf32> to vector<16x8xbf16>
    %c1_63 = arith.constant 1 : index
    %c0_64 = arith.constant 0 : index
    %c0_65 = arith.constant 0 : index
    %97 = vector.load %arg10[%c1_63, %c0_64, %c0_65] : memref<4x8x32xbf16, #tpu.memory_space<vmem>>, vector<1x8x32xbf16>
    %98 = vector.shape_cast %97 : vector<1x8x32xbf16> to vector<8x32xbf16>
    %cst_66 = arith.constant dense<0.000000e+00> : vector<16x32xf32>
    %99 = tpu.matmul %96, %98, %cst_66 {dimension_numbers = #tpu.dot_dimension_numbers<[1], [0], [0], [1], [0, 0, 1, 1], [], []>} : vector<16x8xbf16>, vector<8x32xbf16>, vector<16x32xf32> -> vector<16x32xf32>
    %100 = arith.addf %56, %99 : vector<16x32xf32>
    %c2 = arith.constant 2 : index
    %c0_67 = arith.constant 0 : index
    %c0_68 = arith.constant 0 : index
    %101 = vector.load %arg4[%c2, %c0_67, %c0_68] : memref<4x32x8xbf16, #tpu.memory_space<vmem>>, vector<1x32x8xbf16>
    %102 = vector.shape_cast %101 : vector<1x32x8xbf16> to vector<32x8xbf16>
    %cst_69 = arith.constant dense<0.000000e+00> : vector<16x8xf32>
    %103 = tpu.matmul %4, %102, %cst_69 {dimension_numbers = #tpu.dot_dimension_numbers<[1], [0], [0], [1], [0, 0, 1, 1], [], []>} : vector<16x32xbf16>, vector<32x8xbf16>, vector<16x8xf32> -> vector<16x8xf32>
    %c2_70 = arith.constant 2 : index
    %c0_71 = arith.constant 0 : index
    %c0_72 = arith.constant 0 : index
    %104 = vector.load %arg5[%c2_70, %c0_71, %c0_72] : memref<4x1x8xf32, #tpu.memory_space<vmem>>, vector<1x1x8xf32>
    %105 = vector.shape_cast %104 : vector<1x1x8xf32> to vector<1x8xf32>
    %106 = vector.broadcast %105 : vector<1x8xf32> to vector<16x8xf32>
    %107 = arith.addf %103, %106 : vector<16x8xf32>
    %c2_73 = arith.constant 2 : index
    %c0_74 = arith.constant 0 : index
    %c0_75 = arith.constant 0 : index
    %108 = vector.load %arg6[%c2_73, %c0_74, %c0_75] : memref<4x32x8xbf16, #tpu.memory_space<vmem>>, vector<1x32x8xbf16>
    %109 = vector.shape_cast %108 : vector<1x32x8xbf16> to vector<32x8xbf16>
    %cst_76 = arith.constant dense<0.000000e+00> : vector<16x8xf32>
    %110 = tpu.matmul %5, %109, %cst_76 {dimension_numbers = #tpu.dot_dimension_numbers<[1], [0], [0], [1], [0, 0, 1, 1], [], []>} : vector<16x32xbf16>, vector<32x8xbf16>, vector<16x8xf32> -> vector<16x8xf32>
    %c2_77 = arith.constant 2 : index
    %c0_78 = arith.constant 0 : index
    %c0_79 = arith.constant 0 : index
    %111 = vector.load %arg7[%c2_77, %c0_78, %c0_79] : memref<4x1x8xf32, #tpu.memory_space<vmem>>, vector<1x1x8xf32>
    %112 = vector.shape_cast %111 : vector<1x1x8xf32> to vector<1x8xf32>
    %113 = vector.broadcast %112 : vector<1x8xf32> to vector<16x8xf32>
    %114 = arith.addf %110, %113 : vector<16x8xf32>
    %c2_80 = arith.constant 2 : index
    %c0_81 = arith.constant 0 : index
    %c0_82 = arith.constant 0 : index
    %115 = vector.load %arg8[%c2_80, %c0_81, %c0_82] : memref<4x32x8xbf16, #tpu.memory_space<vmem>>, vector<1x32x8xbf16>
    %116 = vector.shape_cast %115 : vector<1x32x8xbf16> to vector<32x8xbf16>
    %cst_83 = arith.constant dense<0.000000e+00> : vector<16x8xf32>
    %117 = tpu.matmul %5, %116, %cst_83 {dimension_numbers = #tpu.dot_dimension_numbers<[1], [0], [0], [1], [0, 0, 1, 1], [], []>} : vector<16x32xbf16>, vector<32x8xbf16>, vector<16x8xf32> -> vector<16x8xf32>
    %118 = arith.truncf %107 : vector<16x8xf32> to vector<16x8xbf16>
    %119 = arith.truncf %114 : vector<16x8xf32> to vector<16x8xbf16>
    %cst_84 = arith.constant dense<0.000000e+00> : vector<16x16xf32>
    %120 = tpu.matmul %118, %119, %cst_84 {dimension_numbers = #tpu.dot_dimension_numbers<[1], [1], [0], [0], [0, 0, 1, 0], [], []>} : vector<16x8xbf16>, vector<16x8xbf16>, vector<16x16xf32> -> vector<16x16xf32>
    %121 = vector.broadcast %11 : vector<1x16xf32> to vector<16x16xf32>
    %122 = arith.addf %120, %121 : vector<16x16xf32>
    %cst_85 = arith.constant dense<0xFF800000> : vector<16xf32>
    %123 = vector.multi_reduction <maximumf>, %122, %cst_85 [1] : vector<16x16xf32> to vector<16xf32>
    %124 = vector.shape_cast %123 : vector<16xf32> to vector<16x1xf32>
    %125 = vector.broadcast %124 : vector<16x1xf32> to vector<16x16xf32>
    %126 = arith.subf %122, %125 : vector<16x16xf32>
    %127 = math.exp %126 : vector<16x16xf32>
    %cst_86 = arith.constant dense<0.000000e+00> : vector<16xf32>
    %128 = vector.multi_reduction <add>, %127, %cst_86 [1] : vector<16x16xf32> to vector<16xf32>
    %129 = vector.shape_cast %128 : vector<16xf32> to vector<16x1xf32>
    %130 = arith.truncf %127 : vector<16x16xf32> to vector<16x16xbf16>
    %131 = arith.truncf %117 : vector<16x8xf32> to vector<16x8xbf16>
    %cst_87 = arith.constant dense<0.000000e+00> : vector<16x8xf32>
    %132 = tpu.matmul %130, %131, %cst_87 {dimension_numbers = #tpu.dot_dimension_numbers<[1], [0], [0], [1], [0, 0, 1, 1], [], []>} : vector<16x16xbf16>, vector<16x8xbf16>, vector<16x8xf32> -> vector<16x8xf32>
    %133 = tpu.reciprocal %129 {approx = true} : vector<16x1xf32> -> vector<16x1xf32>
    %134 = vector.broadcast %133 : vector<16x1xf32> to vector<16x8xf32>
    %135 = arith.mulf %132, %134 : vector<16x8xf32>
    %c2_88 = arith.constant 2 : index
    %c0_89 = arith.constant 0 : index
    %c0_90 = arith.constant 0 : index
    %136 = vector.load %arg9[%c2_88, %c0_89, %c0_90] : memref<4x1x8xf32, #tpu.memory_space<vmem>>, vector<1x1x8xf32>
    %137 = vector.shape_cast %136 : vector<1x1x8xf32> to vector<1x8xf32>
    %138 = vector.broadcast %137 : vector<1x8xf32> to vector<16x8xf32>
    %139 = arith.addf %135, %138 : vector<16x8xf32>
    %140 = arith.truncf %139 : vector<16x8xf32> to vector<16x8xbf16>
    %c2_91 = arith.constant 2 : index
    %c0_92 = arith.constant 0 : index
    %c0_93 = arith.constant 0 : index
    %141 = vector.load %arg10[%c2_91, %c0_92, %c0_93] : memref<4x8x32xbf16, #tpu.memory_space<vmem>>, vector<1x8x32xbf16>
    %142 = vector.shape_cast %141 : vector<1x8x32xbf16> to vector<8x32xbf16>
    %cst_94 = arith.constant dense<0.000000e+00> : vector<16x32xf32>
    %143 = tpu.matmul %140, %142, %cst_94 {dimension_numbers = #tpu.dot_dimension_numbers<[1], [0], [0], [1], [0, 0, 1, 1], [], []>} : vector<16x8xbf16>, vector<8x32xbf16>, vector<16x32xf32> -> vector<16x32xf32>
    %144 = arith.addf %100, %143 : vector<16x32xf32>
    %c3 = arith.constant 3 : index
    %c0_95 = arith.constant 0 : index
    %c0_96 = arith.constant 0 : index
    %145 = vector.load %arg4[%c3, %c0_95, %c0_96] : memref<4x32x8xbf16, #tpu.memory_space<vmem>>, vector<1x32x8xbf16>
    %146 = vector.shape_cast %145 : vector<1x32x8xbf16> to vector<32x8xbf16>
    %cst_97 = arith.constant dense<0.000000e+00> : vector<16x8xf32>
    %147 = tpu.matmul %4, %146, %cst_97 {dimension_numbers = #tpu.dot_dimension_numbers<[1], [0], [0], [1], [0, 0, 1, 1], [], []>} : vector<16x32xbf16>, vector<32x8xbf16>, vector<16x8xf32> -> vector<16x8xf32>
    %c3_98 = arith.constant 3 : index
    %c0_99 = arith.constant 0 : index
    %c0_100 = arith.constant 0 : index
    %148 = vector.load %arg5[%c3_98, %c0_99, %c0_100] : memref<4x1x8xf32, #tpu.memory_space<vmem>>, vector<1x1x8xf32>
    %149 = vector.shape_cast %148 : vector<1x1x8xf32> to vector<1x8xf32>
    %150 = vector.broadcast %149 : vector<1x8xf32> to vector<16x8xf32>
    %151 = arith.addf %147, %150 : vector<16x8xf32>
    %c3_101 = arith.constant 3 : index
    %c0_102 = arith.constant 0 : index
    %c0_103 = arith.constant 0 : index
    %152 = vector.load %arg6[%c3_101, %c0_102, %c0_103] : memref<4x32x8xbf16, #tpu.memory_space<vmem>>, vector<1x32x8xbf16>
    %153 = vector.shape_cast %152 : vector<1x32x8xbf16> to vector<32x8xbf16>
    %cst_104 = arith.constant dense<0.000000e+00> : vector<16x8xf32>
    %154 = tpu.matmul %5, %153, %cst_104 {dimension_numbers = #tpu.dot_dimension_numbers<[1], [0], [0], [1], [0, 0, 1, 1], [], []>} : vector<16x32xbf16>, vector<32x8xbf16>, vector<16x8xf32> -> vector<16x8xf32>
    %c3_105 = arith.constant 3 : index
    %c0_106 = arith.constant 0 : index
    %c0_107 = arith.constant 0 : index
    %155 = vector.load %arg7[%c3_105, %c0_106, %c0_107] : memref<4x1x8xf32, #tpu.memory_space<vmem>>, vector<1x1x8xf32>
    %156 = vector.shape_cast %155 : vector<1x1x8xf32> to vector<1x8xf32>
    %157 = vector.broadcast %156 : vector<1x8xf32> to vector<16x8xf32>
    %158 = arith.addf %154, %157 : vector<16x8xf32>
    %c3_108 = arith.constant 3 : index
    %c0_109 = arith.constant 0 : index
    %c0_110 = arith.constant 0 : index
    %159 = vector.load %arg8[%c3_108, %c0_109, %c0_110] : memref<4x32x8xbf16, #tpu.memory_space<vmem>>, vector<1x32x8xbf16>
    %160 = vector.shape_cast %159 : vector<1x32x8xbf16> to vector<32x8xbf16>
    %cst_111 = arith.constant dense<0.000000e+00> : vector<16x8xf32>
    %161 = tpu.matmul %5, %160, %cst_111 {dimension_numbers = #tpu.dot_dimension_numbers<[1], [0], [0], [1], [0, 0, 1, 1], [], []>} : vector<16x32xbf16>, vector<32x8xbf16>, vector<16x8xf32> -> vector<16x8xf32>
    %162 = arith.truncf %151 : vector<16x8xf32> to vector<16x8xbf16>
    %163 = arith.truncf %158 : vector<16x8xf32> to vector<16x8xbf16>
    %cst_112 = arith.constant dense<0.000000e+00> : vector<16x16xf32>
    %164 = tpu.matmul %162, %163, %cst_112 {dimension_numbers = #tpu.dot_dimension_numbers<[1], [1], [0], [0], [0, 0, 1, 0], [], []>} : vector<16x8xbf16>, vector<16x8xbf16>, vector<16x16xf32> -> vector<16x16xf32>
    %165 = vector.broadcast %11 : vector<1x16xf32> to vector<16x16xf32>
    %166 = arith.addf %164, %165 : vector<16x16xf32>
    %cst_113 = arith.constant dense<0xFF800000> : vector<16xf32>
    %167 = vector.multi_reduction <maximumf>, %166, %cst_113 [1] : vector<16x16xf32> to vector<16xf32>
    %168 = vector.shape_cast %167 : vector<16xf32> to vector<16x1xf32>
    %169 = vector.broadcast %168 : vector<16x1xf32> to vector<16x16xf32>
    %170 = arith.subf %166, %169 : vector<16x16xf32>
    %171 = math.exp %170 : vector<16x16xf32>
    %cst_114 = arith.constant dense<0.000000e+00> : vector<16xf32>
    %172 = vector.multi_reduction <add>, %171, %cst_114 [1] : vector<16x16xf32> to vector<16xf32>
    %173 = vector.shape_cast %172 : vector<16xf32> to vector<16x1xf32>
    %174 = arith.truncf %171 : vector<16x16xf32> to vector<16x16xbf16>
    %175 = arith.truncf %161 : vector<16x8xf32> to vector<16x8xbf16>
    %cst_115 = arith.constant dense<0.000000e+00> : vector<16x8xf32>
    %176 = tpu.matmul %174, %175, %cst_115 {dimension_numbers = #tpu.dot_dimension_numbers<[1], [0], [0], [1], [0, 0, 1, 1], [], []>} : vector<16x16xbf16>, vector<16x8xbf16>, vector<16x8xf32> -> vector<16x8xf32>
    %177 = tpu.reciprocal %173 {approx = true} : vector<16x1xf32> -> vector<16x1xf32>
    %178 = vector.broadcast %177 : vector<16x1xf32> to vector<16x8xf32>
    %179 = arith.mulf %176, %178 : vector<16x8xf32>
    %c3_116 = arith.constant 3 : index
    %c0_117 = arith.constant 0 : index
    %c0_118 = arith.constant 0 : index
    %180 = vector.load %arg9[%c3_116, %c0_117, %c0_118] : memref<4x1x8xf32, #tpu.memory_space<vmem>>, vector<1x1x8xf32>
    %181 = vector.shape_cast %180 : vector<1x1x8xf32> to vector<1x8xf32>
    %182 = vector.broadcast %181 : vector<1x8xf32> to vector<16x8xf32>
    %183 = arith.addf %179, %182 : vector<16x8xf32>
    %184 = arith.truncf %183 : vector<16x8xf32> to vector<16x8xbf16>
    %c3_119 = arith.constant 3 : index
    %c0_120 = arith.constant 0 : index
    %c0_121 = arith.constant 0 : index
    %185 = vector.load %arg10[%c3_119, %c0_120, %c0_121] : memref<4x8x32xbf16, #tpu.memory_space<vmem>>, vector<1x8x32xbf16>
    %186 = vector.shape_cast %185 : vector<1x8x32xbf16> to vector<8x32xbf16>
    %cst_122 = arith.constant dense<0.000000e+00> : vector<16x32xf32>
    %187 = tpu.matmul %184, %186, %cst_122 {dimension_numbers = #tpu.dot_dimension_numbers<[1], [0], [0], [1], [0, 0, 1, 1], [], []>} : vector<16x8xbf16>, vector<8x32xbf16>, vector<16x32xf32> -> vector<16x32xf32>
    %188 = arith.addf %144, %187 : vector<16x32xf32>
    %c0_123 = arith.constant 0 : index
    %c0_124 = arith.constant 0 : index
    %189 = vector.load %arg11[%c0_123, %c0_124] : memref<1x32xf32, #tpu.memory_space<vmem>>, vector<1x32xf32>
    %190 = vector.broadcast %189 : vector<1x32xf32> to vector<16x32xf32>
    %191 = arith.addf %188, %190 : vector<16x32xf32>
    %192 = arith.addf %191, %1 : vector<16x32xf32>
    %cst_125 = arith.constant dense<0.000000e+00> : vector<16xf32>
    %193 = vector.multi_reduction <add>, %192, %cst_125 [1] : vector<16x32xf32> to vector<16xf32>
    %194 = vector.shape_cast %193 : vector<16xf32> to vector<16x1xf32>
    %cst_126 = arith.constant 3.200000e+01 : f32
    %195 = vector.broadcast %cst_126 : f32 to vector<16x1xf32>
    %196 = arith.divf %194, %195 : vector<16x1xf32>
    %197 = vector.broadcast %196 : vector<16x1xf32> to vector<16x32xf32>
    %198 = arith.subf %192, %197 : vector<16x32xf32>
    %199 = arith.mulf %198, %198 : vector<16x32xf32>
    %cst_127 = arith.constant dense<0.000000e+00> : vector<16xf32>
    %200 = vector.multi_reduction <add>, %199, %cst_127 [1] : vector<16x32xf32> to vector<16xf32>
    %201 = vector.shape_cast %200 : vector<16xf32> to vector<16x1xf32>
    %cst_128 = arith.constant 3.200000e+01 : f32
    %202 = vector.broadcast %cst_128 : f32 to vector<16x1xf32>
    %203 = arith.divf %201, %202 : vector<16x1xf32>
    %204 = vector.broadcast %196 : vector<16x1xf32> to vector<16x32xf32>
    %205 = arith.subf %192, %204 : vector<16x32xf32>
    %cst_129 = arith.constant 9.99999996E-13 : f32
    %206 = vector.broadcast %cst_129 : f32 to vector<16x1xf32>
    %207 = arith.addf %203, %206 : vector<16x1xf32>
    %208 = math.rsqrt %207 : vector<16x1xf32>
    %209 = vector.broadcast %208 : vector<16x1xf32> to vector<16x32xf32>
    %210 = arith.mulf %205, %209 : vector<16x32xf32>
    %c0_130 = arith.constant 0 : index
    %c0_131 = arith.constant 0 : index
    %211 = vector.load %arg12[%c0_130, %c0_131] : memref<1x32xf32, #tpu.memory_space<vmem>>, vector<1x32xf32>
    %212 = vector.broadcast %211 : vector<1x32xf32> to vector<16x32xf32>
    %213 = arith.mulf %210, %212 : vector<16x32xf32>
    %c0_132 = arith.constant 0 : index
    %c0_133 = arith.constant 0 : index
    %214 = vector.load %arg13[%c0_132, %c0_133] : memref<1x32xf32, #tpu.memory_space<vmem>>, vector<1x32xf32>
    %215 = vector.broadcast %214 : vector<1x32xf32> to vector<16x32xf32>
    %216 = arith.addf %213, %215 : vector<16x32xf32>
    %c0_134 = arith.constant 0 : index
    %c0_135 = arith.constant 0 : index
    %c0_136 = arith.constant 0 : index
    %217 = vector.load %arg14[%c0_134, %c0_135, %c0_136] : memref<1x16x32xf32, #tpu.memory_space<vmem>>, vector<1x16x32xf32>
    %218 = vector.shape_cast %217 : vector<1x16x32xf32> to vector<16x32xf32>
    %219 = vector.shape_cast %216 : vector<16x32xf32> to vector<1x16x32xf32>
    tpu.vector_store %arg14[%c0_134, %c0_135, %c0_136], %219 {strides = array<i32>} : memref<1x16x32xf32, #tpu.memory_space<vmem>>, vector<1x16x32xf32>,
    return
  }
  func.func @transform_0(%arg0: i32) -> (i32, i32, i32) {
    %c0_i32 = arith.constant 0 : i32
    %c0_i32_0 = arith.constant 0 : i32
    %c0_i32_1 = arith.constant 0 : i32
    return %arg0, %c0_i32, %c0_i32_0 : i32, i32, i32
  }
  func.func @transform_1(%arg0: i32) -> (i32, i32, i32) {
    %c0_i32 = arith.constant 0 : i32
    %c0_i32_0 = arith.constant 0 : i32
    %c0_i32_1 = arith.constant 0 : i32
    return %arg0, %c0_i32, %c0_i32_0 : i32, i32, i32
  }
  func.func @transform_2(%arg0: i32) -> (i32, i32, i32) {
    %c0_i32 = arith.constant 0 : i32
    %c0_i32_0 = arith.constant 0 : i32
    %c0_i32_1 = arith.constant 0 : i32
    return %arg0, %c0_i32, %c0_i32_0 : i32, i32, i32
  }
  func.func @transform_3(%arg0: i32) -> (i32, i32, i32) {
    %c0_i32 = arith.constant 0 : i32
    %c0_i32_0 = arith.constant 0 : i32
    %c0_i32_1 = arith.constant 0 : i32
    %c0_i32_2 = arith.constant 0 : i32
    return %c0_i32, %c0_i32_0, %c0_i32_1 : i32, i32, i32
  }
  func.func @transform_4(%arg0: i32) -> (i32, i32, i32) {
    %c0_i32 = arith.constant 0 : i32
    %c0_i32_0 = arith.constant 0 : i32
    %c0_i32_1 = arith.constant 0 : i32
    %c0_i32_2 = arith.constant 0 : i32
    return %c0_i32, %c0_i32_0, %c0_i32_1 : i32, i32, i32
  }
  func.func @transform_5(%arg0: i32) -> (i32, i32, i32) {
    %c0_i32 = arith.constant 0 : i32
    %c0_i32_0 = arith.constant 0 : i32
    %c0_i32_1 = arith.constant 0 : i32
    %c0_i32_2 = arith.constant 0 : i32
    return %c0_i32, %c0_i32_0, %c0_i32_1 : i32, i32, i32
  }
  func.func @transform_6(%arg0: i32) -> (i32, i32, i32) {
    %c0_i32 = arith.constant 0 : i32
    %c0_i32_0 = arith.constant 0 : i32
    %c0_i32_1 = arith.constant 0 : i32
    %c0_i32_2 = arith.constant 0 : i32
    return %c0_i32, %c0_i32_0, %c0_i32_1 : i32, i32, i32
  }
  func.func @transform_7(%arg0: i32) -> (i32, i32, i32) {
    %c0_i32 = arith.constant 0 : i32
    %c0_i32_0 = arith.constant 0 : i32
    %c0_i32_1 = arith.constant 0 : i32
    %c0_i32_2 = arith.constant 0 : i32
    return %c0_i32, %c0_i32_0, %c0_i32_1 : i32, i32, i32
  }
  func.func @transform_8(%arg0: i32) -> (i32, i32, i32) {
    %c0_i32 = arith.constant 0 : i32
    %c0_i32_0 = arith.constant 0 : i32
    %c0_i32_1 = arith.constant 0 : i32
    %c0_i32_2 = arith.constant 0 : i32
    return %c0_i32, %c0_i32_0, %c0_i32_1 : i32, i32, i32
  }
  func.func @transform_9(%arg0: i32) -> (i32, i32, i32) {
    %c0_i32 = arith.constant 0 : i32
    %c0_i32_0 = arith.constant 0 : i32
    %c0_i32_1 = arith.constant 0 : i32
    %c0_i32_2 = arith.constant 0 : i32
    return %c0_i32, %c0_i32_0, %c0_i32_1 : i32, i32, i32
  }
  func.func @transform_10(%arg0: i32) -> (i32, i32) {
    %c0_i32 = arith.constant 0 : i32
    %c0_i32_0 = arith.constant 0 : i32
    %c0_i32_1 = arith.constant 0 : i32
    return %c0_i32, %c0_i32_0 : i32, i32
  }
  func.func @transform_11(%arg0: i32) -> (i32, i32) {
    %c0_i32 = arith.constant 0 : i32
    %c0_i32_0 = arith.constant 0 : i32
    %c0_i32_1 = arith.constant 0 : i32
    return %c0_i32, %c0_i32_0 : i32, i32
  }
  func.func @transform_12(%arg0: i32) -> (i32, i32) {
    %c0_i32 = arith.constant 0 : i32
    %c0_i32_0 = arith.constant 0 : i32
    %c0_i32_1 = arith.constant 0 : i32
    return %c0_i32, %c0_i32_0 : i32, i32
  }
  func.func @transform_13(%arg0: i32) -> (i32, i32, i32) {
    %c0_i32 = arith.constant 0 : i32
    %c0_i32_0 = arith.constant 0 : i32
    %c0_i32_1 = arith.constant 0 : i32
    return %arg0, %c0_i32, %c0_i32_0 : i32, i32, i32
  }
}

</mosaic_0001>

<llo_original>
// kernel: tpu_custom_call.1
$region0: #{tpu_custom_call.1}
  #allocation0 [shape = 'u32[]', space=smem, size = 0x4, offset = 0x4, fixed_abs, tag = 'smem constant byte address 0x4 - core index']
  #allocation1 [shape = 'u32[144,128]{1,0:T(1,128)}', space=vmem, size = 0x12000, scoped, tag = 'internal scratch']
  %s0 = inlined_call_operand.vmem [shape: f32[2,16,32], index: 0, kind: input, shape index: {}]
  %s1 = inlined_call_operand.vmem [shape: f32[2,16,32], index: 1, kind: input, shape index: {}]
  %s2 = inlined_call_operand.vmem [shape: f32[2,1,16], index: 2, kind: input, shape index: {}]
  %s3 = inlined_call_operand.vmem [shape: bf16[4,32,8], index: 3, kind: input, shape index: {}]
  %s4 = inlined_call_operand.vmem [shape: f32[4,1,8], index: 4, kind: input, shape index: {}]
  %s5 = inlined_call_operand.vmem [shape: bf16[4,32,8], index: 5, kind: input, shape index: {}]
  %s6 = inlined_call_operand.vmem [shape: f32[4,1,8], index: 6, kind: input, shape index: {}]
  %s7 = inlined_call_operand.vmem [shape: bf16[4,32,8], index: 7, kind: input, shape index: {}]
  %s8 = inlined_call_operand.vmem [shape: f32[4,1,8], index: 8, kind: input, shape index: {}]
  %s9 = inlined_call_operand.vmem [shape: bf16[4,8,32], index: 9, kind: input, shape index: {}]
  %s10 = inlined_call_operand.vmem [shape: f32[1,32], index: 10, kind: input, shape index: {}]
  %s11 = inlined_call_operand.vmem [shape: f32[1,32], index: 11, kind: input, shape index: {}]
  %s12 = inlined_call_operand.vmem [shape: f32[1,32], index: 12, kind: input, shape index: {}]
  %s13 = inlined_call_operand.hbm [shape: f32[2,16,32], index: 13, kind: output, shape index: {}]
  %s14 = sld [smem:[#allocation0]]
  $region85: #{tpu_custom_call.1} parent=0
    _
  %s16 = ssub.s32 1, %s14
  %s17 = scalar_select 0, %s16, %s14
  $region1: #{tpu_custom_call.1} parent=0
    #allocation2 [shape = 'u8[16384]{0}', space=vmem, size = 0x4000, scoped, tag = 'output window, operand 0']
    #allocation3 [shape = 's32[2]{0}', space=sflag, size = 0x8, scoped, tag = 'scoped memory for tpu_custom_call.1']
    %18 = vsyncpa [#allocation3], 0
    %s19 = scalar_lea.sflag [#allocation3], 1
    %20 = vsyncpa %s19, 0
    loop: start=0, step=1, limit=4
    $region2: #{tpu_custom_call.1} parent=1 // loop_pre_header
      _
    $region3: #{tpu_custom_call.1} parent=1 // loop_header
      %s22 = sphi 0, %s26
      %p23 = scmp.ge.s32.totalorder %s22, 4
      %s32 = sphi 0, %s34
      %s35 = sphi 0, %s32
      %s36 = sphi 0, %s35
      %s52 = sphi 0, %s36
      %s58 = sphi 0, %s60
      %s61 = sphi 0, %s58
      %s62 = sphi 0, %s61
      %s78 = sphi 0, %s62
      %s84 = sphi 0, %s86
      %s87 = sphi 0, %s84
      %s88 = sphi 0, %s87
      %s104 = sphi 0, %s88
      %s108 = sphi 0, %s108
      %s110 = sphi 0, %s108
      %s111 = sphi 0, %s110
      %s125 = sphi 0, %s111
      %s129 = sphi 0, %s129
      %s131 = sphi 0, %s129
      %s132 = sphi 0, %s131
      %s146 = sphi 0, %s132
      %s150 = sphi 0, %s150
      %s152 = sphi 0, %s150
      %s153 = sphi 0, %s152
      %s167 = sphi 0, %s153
      %s171 = sphi 0, %s171
      %s173 = sphi 0, %s171
      %s174 = sphi 0, %s173
      %s188 = sphi 0, %s174
      %s192 = sphi 0, %s192
      %s194 = sphi 0, %s192
      %s195 = sphi 0, %s194
      %s209 = sphi 0, %s195
      %s213 = sphi 0, %s213
      %s215 = sphi 0, %s213
      %s216 = sphi 0, %s215
      %s230 = sphi 0, %s216
      %s234 = sphi 0, %s234
      %s236 = sphi 0, %s234
      %s237 = sphi 0, %s236
      %s251 = sphi 0, %s237
      %s255 = sphi 0, %s255
      %s257 = sphi 0, %s255
      %s258 = sphi 0, %s257
      %s272 = sphi 0, %s258
      %s276 = sphi 0, %s276
      %s278 = sphi 0, %s276
      %s279 = sphi 0, %s278
      %s293 = sphi 0, %s279
      %s297 = sphi 0, %s297
      %s299 = sphi 0, %s297
      %s300 = sphi 0, %s299
      %s314 = sphi 0, %s300
      %s320 = sphi 0, %s322
      %s323 = sphi 0, %s320
      %s324 = sphi 0, %s323
      %s340 = sphi 0, %s324
    $region4: #{tpu_custom_call.1} parent=1 // loop_header_branch
      %25 = sbr.rel (%p23) target = $region8
    $region5: #{tpu_custom_call.1} parent=1 // loop_body
      %s27 = ssub.s32 %s22, 1
      %s28 = ssub.s32 %s22, 2
      %s29 = sadd.s32 %s22, 1
      %s30 = ssub.s32 %s22, %s29
      %p31 = scmp.eq.s32.totalorder %s30, 0
      %s33 = sadd.s32 %s32, 1
      %s34 = scalar_select %p31, %s32, %s33
      %p37 = pneg %p31
      %p38 = scmp.eq.s32.totalorder %s22, 1
      %p39 = por %p37, %p38
      %p40 = scmp.ne.s32.totalorder %s32, %s35
      %p41 = scmp.eq.s32.totalorder %s22, 0
      %p42 = por %p40, %p41
      %p43 = scmp.ne.s32.totalorder %s32, %s35
      %p44 = scmp.eq.s32.totalorder %s27, 1
      %p45 = por %p43, %p44
      %p46 = scmp.ne.s32.totalorder %s35, %s36
      %p47 = scmp.eq.s32.totalorder %s27, 0
      %p48 = por %p46, %p47
      %p49 = scmp.ne.s32.totalorder %s35, %s36
      %p50 = scmp.eq.s32.totalorder %s28, 1
      %p51 = por %p49, %p50
      %p53 = scmp.ne.s32.totalorder %s36, %s52
      %p54 = scmp.eq.s32.totalorder %s28, 0
      %p55 = por %p53, %p54
      %s56 = ssub.s32 %s22, %s29
      %p57 = scmp.eq.s32.totalorder %s56, 0
      %s59 = sadd.s32 %s58, 1
      %s60 = scalar_select %p57, %s58, %s59
      %p63 = pneg %p57
      %p64 = scmp.eq.s32.totalorder %s22, 1
      %p65 = por %p63, %p64
      %p66 = scmp.ne.s32.totalorder %s58, %s61
      %p67 = scmp.eq.s32.totalorder %s22, 0
      %p68 = por %p66, %p67
      %p69 = scmp.ne.s32.totalorder %s58, %s61
      %p70 = scmp.eq.s32.totalorder %s27, 1
      %p71 = por %p69, %p70
      %p72 = scmp.ne.s32.totalorder %s61, %s62
      %p73 = scmp.eq.s32.totalorder %s27, 0
      %p74 = por %p72, %p73
      %p75 = scmp.ne.s32.totalorder %s61, %s62
      %p76 = scmp.eq.s32.totalorder %s28, 1
      %p77 = por %p75, %p76
      %p79 = scmp.ne.s32.totalorder %s62, %s78
      %p80 = scmp.eq.s32.totalorder %s28, 0
      %p81 = por %p79, %p80
      %s82 = ssub.s32 %s22, %s29
      %p83 = scmp.eq.s32.totalorder %s82, 0
      %s85 = sadd.s32 %s84, 1
      %s86 = scalar_select %p83, %s84, %s85
      %p89 = pneg %p83
      %p90 = scmp.eq.s32.totalorder %s22, 1
      %p91 = por %p89, %p90
      %p92 = scmp.ne.s32.totalorder %s84, %s87
      %p93 = scmp.eq.s32.totalorder %s22, 0
      %p94 = por %p92, %p93
      %p95 = scmp.ne.s32.totalorder %s84, %s87
      %p96 = scmp.eq.s32.totalorder %s27, 1
      %p97 = por %p95, %p96
      %p98 = scmp.ne.s32.totalorder %s87, %s88
      %p99 = scmp.eq.s32.totalorder %s27, 0
      %p100 = por %p98, %p99
      %p101 = scmp.ne.s32.totalorder %s87, %s88
      %p102 = scmp.eq.s32.totalorder %s28, 1
      %p103 = por %p101, %p102
      %p105 = scmp.ne.s32.totalorder %s88, %s104
      %p106 = scmp.eq.s32.totalorder %s28, 0
      %p107 = por %p105, %p106
      %s109 = sadd.s32 %s108, 1
      %p112 = scmp.eq.s32.totalorder %s22, 1
      %p113 = scmp.ne.s32.totalorder %s108, %s110
      %p114 = scmp.eq.s32.totalorder %s22, 0
      %p115 = por %p113, %p114
      %p116 = scmp.ne.s32.totalorder %s108, %s110
      %p117 = scmp.eq.s32.totalorder %s27, 1
      %p118 = por %p116, %p117
      %p119 = scmp.ne.s32.totalorder %s110, %s111
      %p120 = scmp.eq.s32.totalorder %s27, 0
      %p121 = por %p119, %p120
      %p122 = scmp.ne.s32.totalorder %s110, %s111
      %p123 = scmp.eq.s32.totalorder %s28, 1
      %p124 = por %p122, %p123
      %p126 = scmp.ne.s32.totalorder %s111, %s125
      %p127 = scmp.eq.s32.totalorder %s28, 0
      %p128 = por %p126, %p127
      %s130 = sadd.s32 %s129, 1
      %p133 = scmp.eq.s32.totalorder %s22, 1
      %p134 = scmp.ne.s32.totalorder %s129, %s131
      %p135 = scmp.eq.s32.totalorder %s22, 0
      %p136 = por %p134, %p135
      %p137 = scmp.ne.s32.totalorder %s129, %s131
      %p138 = scmp.eq.s32.totalorder %s27, 1
      %p139 = por %p137, %p138
      %p140 = scmp.ne.s32.totalorder %s131, %s132
      %p141 = scmp.eq.s32.totalorder %s27, 0
      %p142 = por %p140, %p141
      %p143 = scmp.ne.s32.totalorder %s131, %s132
      %p144 = scmp.eq.s32.totalorder %s28, 1
      %p145 = por %p143, %p144
      %p147 = scmp.ne.s32.totalorder %s132, %s146
      %p148 = scmp.eq.s32.totalorder %s28, 0
      %p149 = por %p147, %p148
      %s151 = sadd.s32 %s150, 1
      %p154 = scmp.eq.s32.totalorder %s22, 1
      %p155 = scmp.ne.s32.totalorder %s150, %s152
      %p156 = scmp.eq.s32.totalorder %s22, 0
      %p157 = por %p155, %p156
      %p158 = scmp.ne.s32.totalorder %s150, %s152
      %p159 = scmp.eq.s32.totalorder %s27, 1
      %p160 = por %p158, %p159
      %p161 = scmp.ne.s32.totalorder %s152, %s153
      %p162 = scmp.eq.s32.totalorder %s27, 0
      %p163 = por %p161, %p162
      %p164 = scmp.ne.s32.totalorder %s152, %s153
      %p165 = scmp.eq.s32.totalorder %s28, 1
      %p166 = por %p164, %p165
      %p168 = scmp.ne.s32.totalorder %s153, %s167
      %p169 = scmp.eq.s32.totalorder %s28, 0
      %p170 = por %p168, %p169
      %s172 = sadd.s32 %s171, 1
      %p175 = scmp.eq.s32.totalorder %s22, 1
      %p176 = scmp.ne.s32.totalorder %s171, %s173
      %p177 = scmp.eq.s32.totalorder %s22, 0
      %p178 = por %p176, %p177
      %p179 = scmp.ne.s32.totalorder %s171, %s173
      %p180 = scmp.eq.s32.totalorder %s27, 1
      %p181 = por %p179, %p180
      %p182 = scmp.ne.s32.totalorder %s173, %s174
      %p183 = scmp.eq.s32.totalorder %s27, 0
      %p184 = por %p182, %p183
      %p185 = scmp.ne.s32.totalorder %s173, %s174
      %p186 = scmp.eq.s32.totalorder %s28, 1
      %p187 = por %p185, %p186
      %p189 = scmp.ne.s32.totalorder %s174, %s188
      %p190 = scmp.eq.s32.totalorder %s28, 0
      %p191 = por %p189, %p190
      %s193 = sadd.s32 %s192, 1
      %p196 = scmp.eq.s32.totalorder %s22, 1
      %p197 = scmp.ne.s32.totalorder %s192, %s194
      %p198 = scmp.eq.s32.totalorder %s22, 0
      %p199 = por %p197, %p198
      %p200 = scmp.ne.s32.totalorder %s192, %s194
      %p201 = scmp.eq.s32.totalorder %s27, 1
      %p202 = por %p200, %p201
      %p203 = scmp.ne.s32.totalorder %s194, %s195
      %p204 = scmp.eq.s32.totalorder %s27, 0
      %p205 = por %p203, %p204
      %p206 = scmp.ne.s32.totalorder %s194, %s195
      %p207 = scmp.eq.s32.totalorder %s28, 1
      %p208 = por %p206, %p207
      %p210 = scmp.ne.s32.totalorder %s195, %s209
      %p211 = scmp.eq.s32.totalorder %s28, 0
      %p212 = por %p210, %p211
      %s214 = sadd.s32 %s213, 1
      %p217 = scmp.eq.s32.totalorder %s22, 1
      %p218 = scmp.ne.s32.totalorder %s213, %s215
      %p219 = scmp.eq.s32.totalorder %s22, 0
      %p220 = por %p218, %p219
      %p221 = scmp.ne.s32.totalorder %s213, %s215
      %p222 = scmp.eq.s32.totalorder %s27, 1
      %p223 = por %p221, %p222
      %p224 = scmp.ne.s32.totalorder %s215, %s216
      %p225 = scmp.eq.s32.totalorder %s27, 0
      %p226 = por %p224, %p225
      %p227 = scmp.ne.s32.totalorder %s215, %s216
      %p228 = scmp.eq.s32.totalorder %s28, 1
      %p229 = por %p227, %p228
      %p231 = scmp.ne.s32.totalorder %s216, %s230
      %p232 = scmp.eq.s32.totalorder %s28, 0
      %p233 = por %p231, %p232
      %s235 = sadd.s32 %s234, 1
      %p238 = scmp.eq.s32.totalorder %s22, 1
      %p239 = scmp.ne.s32.totalorder %s234, %s236
      %p240 = scmp.eq.s32.totalorder %s22, 0
      %p241 = por %p239, %p240
      %p242 = scmp.ne.s32.totalorder %s234, %s236
      %p243 = scmp.eq.s32.totalorder %s27, 1
      %p244 = por %p242, %p243
      %p245 = scmp.ne.s32.totalorder %s236, %s237
      %p246 = scmp.eq.s32.totalorder %s27, 0
      %p247 = por %p245, %p246
      %p248 = scmp.ne.s32.totalorder %s236, %s237
      %p249 = scmp.eq.s32.totalorder %s28, 1
      %p250 = por %p248, %p249
      %p252 = scmp.ne.s32.totalorder %s237, %s251
      %p253 = scmp.eq.s32.totalorder %s28, 0
      %p254 = por %p252, %p253
      %s256 = sadd.s32 %s255, 1
      %p259 = scmp.eq.s32.totalorder %s22, 1
      %p260 = scmp.ne.s32.totalorder %s255, %s257
      %p261 = scmp.eq.s32.totalorder %s22, 0
      %p262 = por %p260, %p261
      %p263 = scmp.ne.s32.totalorder %s255, %s257
      %p264 = scmp.eq.s32.totalorder %s27, 1
      %p265 = por %p263, %p264
      %p266 = scmp.ne.s32.totalorder %s257, %s258
      %p267 = scmp.eq.s32.totalorder %s27, 0
      %p268 = por %p266, %p267
      %p269 = scmp.ne.s32.totalorder %s257, %s258
      %p270 = scmp.eq.s32.totalorder %s28, 1
      %p271 = por %p269, %p270
      %p273 = scmp.ne.s32.totalorder %s258, %s272
      %p274 = scmp.eq.s32.totalorder %s28, 0
      %p275 = por %p273, %p274
      %s277 = sadd.s32 %s276, 1
      %p280 = scmp.eq.s32.totalorder %s22, 1
      %p281 = scmp.ne.s32.totalorder %s276, %s278
      %p282 = scmp.eq.s32.totalorder %s22, 0
      %p283 = por %p281, %p282
      %p284 = scmp.ne.s32.totalorder %s276, %s278
      %p285 = scmp.eq.s32.totalorder %s27, 1
      %p286 = por %p284, %p285
      %p287 = scmp.ne.s32.totalorder %s278, %s279
      %p288 = scmp.eq.s32.totalorder %s27, 0
      %p289 = por %p287, %p288
      %p290 = scmp.ne.s32.totalorder %s278, %s279
      %p291 = scmp.eq.s32.totalorder %s28, 1
      %p292 = por %p290, %p291
      %p294 = scmp.ne.s32.totalorder %s279, %s293
      %p295 = scmp.eq.s32.totalorder %s28, 0
      %p296 = por %p294, %p295
      %s298 = sadd.s32 %s297, 1
      %p301 = scmp.eq.s32.totalorder %s22, 1
      %p302 = scmp.ne.s32.totalorder %s297, %s299
      %p303 = scmp.eq.s32.totalorder %s22, 0
      %p304 = por %p302, %p303
      %p305 = scmp.ne.s32.totalorder %s297, %s299
      %p306 = scmp.eq.s32.totalorder %s27, 1
      %p307 = por %p305, %p306
      %p308 = scmp.ne.s32.totalorder %s299, %s300
      %p309 = scmp.eq.s32.totalorder %s27, 0
      %p310 = por %p308, %p309
      %p311 = scmp.ne.s32.totalorder %s299, %s300
      %p312 = scmp.eq.s32.totalorder %s28, 1
      %p313 = por %p311, %p312
      %p315 = scmp.ne.s32.totalorder %s300, %s314
      %p316 = scmp.eq.s32.totalorder %s28, 0
      %p317 = por %p315, %p316
      %s318 = ssub.s32 %s22, %s29
      %p319 = scmp.eq.s32.totalorder %s318, 0
      %s321 = sadd.s32 %s320, 1
      %s322 = scalar_select %p319, %s320, %s321
      %p325 = pneg %p319
      %p326 = scmp.eq.s32.totalorder %s22, 1
      %p327 = por %p325, %p326
      %p328 = scmp.ne.s32.totalorder %s320, %s323
      %p329 = scmp.eq.s32.totalorder %s22, 0
      %p330 = por %p328, %p329
      %p331 = scmp.ne.s32.totalorder %s320, %s323
      %p332 = scmp.eq.s32.totalorder %s27, 1
      %p333 = por %p331, %p332
      %p334 = scmp.ne.s32.totalorder %s323, %s324
      %p335 = scmp.eq.s32.totalorder %s27, 0
      %p336 = por %p334, %p335
      %p337 = scmp.ne.s32.totalorder %s323, %s324
      %p338 = scmp.eq.s32.totalorder %s28, 1
      %p339 = por %p337, %p338
      %p341 = scmp.ne.s32.totalorder %s324, %s340
      %p342 = scmp.eq.s32.totalorder %s28, 0
      %p343 = por %p341, %p342
      %p344 = scmp.le.s32.totalorder 1, %s22
      %p345 = scmp.lt.s32.totalorder %s22, 3
      %p346 = pnand %p344, %p345
      %p347 = pneg %p346
      // Predicated region
      $region9: #{tpu_custom_call.1} parent=5 // pred_check
        _
      $region10: #{tpu_custom_call.1} parent=5 // pred_check_branch
        %349 = sbr.rel (%p346) target = $region12
      $region11: #{tpu_custom_call.1} parent=5 // pred_region
        %s350 = ssub.s32 %s22, 1
        // Predicated region
        $region13: #{tpu_custom_call.1} parent=11 // pred_check
          %p351 = pneg %p121
        $region14: #{tpu_custom_call.1} parent=11 // pred_check_branch
          %353 = sbr.rel (%p351) target = $region16
        $region15: #{tpu_custom_call.1} parent=11 // pred_region
          _
        $region16: #{tpu_custom_call.1} parent=11 // pred_fallthru
          _
        // Predicated region
        $region17: #{tpu_custom_call.1} parent=11 // pred_check
          %p354 = pneg %p142
        $region18: #{tpu_custom_call.1} parent=11 // pred_check_branch
          %356 = sbr.rel (%p354) target = $region20
        $region19: #{tpu_custom_call.1} parent=11 // pred_region
          _
        $region20: #{tpu_custom_call.1} parent=11 // pred_fallthru
          _
        // Predicated region
        $region21: #{tpu_custom_call.1} parent=11 // pred_check
          %p357 = pneg %p163
        $region22: #{tpu_custom_call.1} parent=11 // pred_check_branch
          %359 = sbr.rel (%p357) target = $region24
        $region23: #{tpu_custom_call.1} parent=11 // pred_region
          _
        $region24: #{tpu_custom_call.1} parent=11 // pred_fallthru
          _
        // Predicated region
        $region25: #{tpu_custom_call.1} parent=11 // pred_check
          %p360 = pneg %p184
        $region26: #{tpu_custom_call.1} parent=11 // pred_check_branch
          %362 = sbr.rel (%p360) target = $region28
        $region27: #{tpu_custom_call.1} parent=11 // pred_region
          _
        $region28: #{tpu_custom_call.1} parent=11 // pred_fallthru
          _
        // Predicated region
        $region29: #{tpu_custom_call.1} parent=11 // pred_check
          %p363 = pneg %p205
        $region30: #{tpu_custom_call.1} parent=11 // pred_check_branch
          %365 = sbr.rel (%p363) target = $region32
        $region31: #{tpu_custom_call.1} parent=11 // pred_region
          _
        $region32: #{tpu_custom_call.1} parent=11 // pred_fallthru
          _
        // Predicated region
        $region33: #{tpu_custom_call.1} parent=11 // pred_check
          %p366 = pneg %p226
        $region34: #{tpu_custom_call.1} parent=11 // pred_check_branch
          %368 = sbr.rel (%p366) target = $region36
        $region35: #{tpu_custom_call.1} parent=11 // pred_region
          _
        $region36: #{tpu_custom_call.1} parent=11 // pred_fallthru
          _
        // Predicated region
        $region37: #{tpu_custom_call.1} parent=11 // pred_check
          %p369 = pneg %p247
        $region38: #{tpu_custom_call.1} parent=11 // pred_check_branch
          %371 = sbr.rel (%p369) target = $region40
        $region39: #{tpu_custom_call.1} parent=11 // pred_region
          _
        $region40: #{tpu_custom_call.1} parent=11 // pred_fallthru
          _
        // Predicated region
        $region41: #{tpu_custom_call.1} parent=11 // pred_check
          %p372 = pneg %p268
        $region42: #{tpu_custom_call.1} parent=11 // pred_check_branch
          %374 = sbr.rel (%p372) target = $region44
        $region43: #{tpu_custom_call.1} parent=11 // pred_region
          _
        $region44: #{tpu_custom_call.1} parent=11 // pred_fallthru
          _
        // Predicated region
        $region45: #{tpu_custom_call.1} parent=11 // pred_check
          %p375 = pneg %p289
        $region46: #{tpu_custom_call.1} parent=11 // pred_check_branch
          %377 = sbr.rel (%p375) target = $region48
        $region47: #{tpu_custom_call.1} parent=11 // pred_region
          _
        $region48: #{tpu_custom_call.1} parent=11 // pred_fallthru
          _
        // Predicated region
        $region49: #{tpu_custom_call.1} parent=11 // pred_check
          %p378 = pneg %p310
        $region50: #{tpu_custom_call.1} parent=11 // pred_check_branch
          %380 = sbr.rel (%p378) target = $region52
        $region51: #{tpu_custom_call.1} parent=11 // pred_region
          _
        $region52: #{tpu_custom_call.1} parent=11 // pred_fallthru
          _
      $region12: #{tpu_custom_call.1} parent=5 // pred_fallthru
        _
      %p381 = scmp.lt.s32.totalorder %s22, 2
      // Predicated region
      $region53: #{tpu_custom_call.1} parent=5 // pred_check
        %p382 = pneg %p381
      $region54: #{tpu_custom_call.1} parent=5 // pred_check_branch
        %384 = sbr.rel (%p382) target = $region56
      $region55: #{tpu_custom_call.1} parent=5 // pred_region
        // Predicated region
        $region57: #{tpu_custom_call.1} parent=55 // pred_check
          %p385 = pneg %p42
        $region58: #{tpu_custom_call.1} parent=55 // pred_check_branch
          %387 = sbr.rel (%p385) target = $region60
        $region59: #{tpu_custom_call.1} parent=55 // pred_region
          %p388 = scmp.lt.s32.totalorder %s22, 1
          %s389 = scalar_select %p388, %s22, 1
          %s390 = smul.addr %s389, 2
          %s391 = smul.addr %s390, 8
          %s392 = scalar_lea.vmem %s0, %s391
        $region60: #{tpu_custom_call.1} parent=55 // pred_fallthru
          _
        // Predicated region
        $region61: #{tpu_custom_call.1} parent=55 // pred_check
          %p393 = pneg %p68
        $region62: #{tpu_custom_call.1} parent=55 // pred_check_branch
          %395 = sbr.rel (%p393) target = $region64
        $region63: #{tpu_custom_call.1} parent=55 // pred_region
          %p396 = scmp.lt.s32.totalorder %s22, 1
          %s397 = scalar_select %p396, %s22, 1
          %s398 = smul.addr %s397, 2
          %s399 = smul.addr %s398, 8
          %s400 = scalar_lea.vmem %s1, %s399
        $region64: #{tpu_custom_call.1} parent=55 // pred_fallthru
          _
        // Predicated region
        $region65: #{tpu_custom_call.1} parent=55 // pred_check
          %p401 = pneg %p94
        $region66: #{tpu_custom_call.1} parent=55 // pred_check_branch
          %403 = sbr.rel (%p401) target = $region68
        $region67: #{tpu_custom_call.1} parent=55 // pred_region
          %p404 = scmp.lt.s32.totalorder %s22, 1
          %s405 = scalar_select %p404, %s22, 1
          %s406 = scalar_lea.vmem %s2, %s405
        $region68: #{tpu_custom_call.1} parent=55 // pred_fallthru
          _
      $region56: #{tpu_custom_call.1} parent=5 // pred_fallthru
        _
      %p407 = scmp.le.s32.totalorder 1, %s22
      %p408 = scmp.lt.s32.totalorder %s22, 3
      %p409 = pnand %p407, %p408
      %p410 = pneg %p409
      // Predicated region
      $region69: #{tpu_custom_call.1} parent=5 // pred_check
        _
      $region70: #{tpu_custom_call.1} parent=5 // pred_check_branch
        %412 = sbr.rel (%p409) target = $region72
      $region71: #{tpu_custom_call.1} parent=5 // pred_region
        %s413 = ssub.s32 %s22, 1
        %p414 = scmp.lt.s32.totalorder %s27, 1
        %s415 = scalar_select %p414, %s27, 1
        %s416 = smul.addr %s415, 2
        %s417 = smul.addr %s416, 8
        %s418 = scalar_lea.vmem %s0, %s417
        %p419 = pneg %p48
        %p420 = pneg %p45
        %p421 = scmp.lt.s32.totalorder %s27, 1
        %s422 = scalar_select %p421, %s27, 1
        %s423 = smul.addr %s422, 2
        %s424 = smul.addr %s423, 8
        %s425 = scalar_lea.vmem %s1, %s424
        %p426 = pneg %p74
        %p427 = pneg %p71
        %p428 = scmp.lt.s32.totalorder %s27, 1
        %s429 = scalar_select %p428, %s27, 1
        %s430 = scalar_lea.vmem %s2, %s429
        %p431 = pneg %p100
        %p432 = pneg %p97
        %p433 = pneg %p121
        %p434 = pneg %p118
        %p435 = pneg %p142
        %p436 = pneg %p139
        %p437 = pneg %p163
        %p438 = pneg %p160
        %p439 = pneg %p184
        %p440 = pneg %p181
        %p441 = pneg %p205
        %p442 = pneg %p202
        %p443 = pneg %p226
        %p444 = pneg %p223
        %p445 = pneg %p247
        %p446 = pneg %p244
        %p447 = pneg %p268
        %p448 = pneg %p265
        %p449 = pneg %p289
        %p450 = pneg %p286
        %p451 = pneg %p310
        %p452 = pneg %p307
        %p453 = pneg %p336
        %p454 = pneg %p333
        %s455 = sand.u32 %s323, 1
        %s456 = scalar_lea.sflag [#allocation3], %s455
        %s457 = sand.u32 %s323, 1
        %s458 = smul.addr %s457, 16
        %s459 = scalar_lea.vmem [#allocation2], %s458
        %p460 = scmp.lt.s32.totalorder %s27, 1
        %s461 = scalar_select %p460, %s27, 1
        %s462 = smul.addr %s461, 2
        %s463 = smul.addr %s462, 8
        %s464 = scalar_lea.vmem %s0, %s463
        %p465 = scmp.lt.s32.totalorder %s27, 1
        %s466 = scalar_select %p465, %s27, 1
        %s467 = smul.addr %s466, 2
        %s468 = smul.addr %s467, 8
        %s469 = scalar_lea.vmem %s1, %s468
        %p470 = scmp.lt.s32.totalorder %s27, 1
        %s471 = scalar_select %p470, %s27, 1
        %s472 = scalar_lea.vmem %s2, %s471
        %v474 = vld [vmem:[%s464] sm:$0xff]
        %v475 = vld [vmem:[%s464 + $0x8] sm:$0xff]
        %v476 = vld [vmem:[%s469] sm:$0xff]
        %v477 = vld [vmem:[%s469 + $0x8] sm:$0xff]
        %v478 = vpack.c.bf16 %v475, %v474
        %v479 = vpack.c.bf16 %v477, %v476
        %v480 = vld [vmem:[%s472] sm:$0x1]
        %v481 = vsub.f32 1.0, %v480
        %v482 = vmul.f32 %v481, -100000.0
        %v483 = vld [vmem:[%s3] sm:$0xf]
        %v484 = vld [vmem:[%s3 + $0x4] sm:$0xf]
        %v485 = vld [vmem:[%s3 + $0x8] sm:$0xf]
        %v486 = vld [vmem:[%s3 + $0xc] sm:$0xf]
        %v487 = vld [vmem:[%s4] sm:$0x1]
        %v489 = vlaneseq
        %v490 = vshrl.u32 %v489, 7
        %v491 = vsub.s32 0, %v490
        %v492 = vrot.slane %v487, %v491
        %v498 = vunpack.c.l.b16 %v483
        %v499 = vunpack.c.l.b16 %v484
        %v500 = vunpack.c.l.b16 %v485
        %v501 = vunpack.c.l.b16 %v486
        %v502 = vpack.c.b16 %v499, %v498
        %v503 = vpack.c.b16 %v501, %v500
        %vm506 = vcmask 261120
        %v508 = vsel %vm506, %v478, 0
        %510 = vmatprep.subr.bf16.mxu0 0
        %511 = vmatpush1.bf16.msra.mxu0 0
        %512 = vmatprep.subr.bf16.mxu0 0
        %513 = vmatpush1.bf16.msra.mxu0 0
        %514 = vmatprep.subr.bf16.mxu0 0
        %515 = vmatpush1.bf16.msra.mxu0 0
        %516 = vmatprep.subr.bf16.mxu0 0
        %517 = vmatpush1.bf16.msra.mxu0 0
        %518 = vmatprep.subr.bf16.mxu0 0
        %519 = vmatpush1.bf16.msra.mxu0 0
        %520 = vmatprep.subr.bf16.mxu0 0
        %521 = vmatpush1.bf16.msra.mxu0 0
        %522 = vmatprep.subr.bf16.mxu0 0
        %523 = vmatpush1.bf16.msra.mxu0 %v503
        %524 = vmatprep.subr.bf16.mxu0 0
        %525 = vmatpush1.bf16.msra.mxu0 %v502
        %526 = vmatprep.subr.bf16.mxu0 0
        %527 = vmatpush2.bf16.msra.mxu0 0
        %528 = vmatprep.subr.bf16.mxu0 0
        %529 = vmatpush2.bf16.msra.mxu0 0
        %530 = vmatprep.subr.bf16.mxu0 0
        %531 = vmatpush2.bf16.msra.mxu0 0
        %532 = vmatprep.subr.bf16.mxu0 0
        %533 = vmatpush2.bf16.msra.mxu0 0
        %534 = vmatprep.subr.bf16.mxu0 0
        %535 = vmatpush2.bf16.msra.mxu0 0
        %536 = vmatprep.subr.bf16.mxu0 0
        %537 = vmatpush2.bf16.msra.mxu0 0
        %538 = vmatprep.subr.bf16.mxu0 0
        %539 = vmatpush2.bf16.msra.mxu0 0
        %540 = vmatprep.subr.bf16.mxu0 0
        %541 = vmatpush2.bf16.msra.mxu0 0
        %542 = vmatprep.mubr.bf16.mxu0 0
        %543 = vmatmul.mubr.bf16.gmra.mxu0 %v508
        %v544 = vpop.f32.mrf.mxu0
        %v545 = vadd.f32 %v492, %v544
        %v546 = vpop.f32.mrf.mxu0
        %v547 = vpop.f32.mrf.mxu0
        %v548 = vadd.f32 %v492, %v547
        %v549 = vpop.f32.mrf.mxu0
        %550 = vdwg.mxu0
        %v551 = vld [vmem:[%s5] sm:$0xf]
        %v552 = vld [vmem:[%s5 + $0x4] sm:$0xf]
        %v553 = vld [vmem:[%s5 + $0x8] sm:$0xf]
        %v554 = vld [vmem:[%s5 + $0xc] sm:$0xf]
        %v555 = vld [vmem:[%s6] sm:$0x1]
        %v557 = vlaneseq
        %v558 = vshrl.u32 %v557, 7
        %v559 = vsub.s32 0, %v558
        %v560 = vrot.slane %v555, %v559
        %v566 = vunpack.c.l.b16 %v551
        %v567 = vunpack.c.l.b16 %v552
        %v568 = vunpack.c.l.b16 %v553
        %v569 = vunpack.c.l.b16 %v554
        %v570 = vpack.c.b16 %v567, %v566
        %v571 = vpack.c.b16 %v569, %v568
        %v575 = vsel %vm506, %v479, 0
        %577 = vmatprep.subr.bf16.mxu0 0
        %578 = vmatpush1.bf16.msra.mxu0 0
        %579 = vmatprep.subr.bf16.mxu0 0
        %580 = vmatpush1.bf16.msra.mxu0 0
        %581 = vmatprep.subr.bf16.mxu0 0
        %582 = vmatpush1.bf16.msra.mxu0 0
        %583 = vmatprep.subr.bf16.mxu0 0
        %584 = vmatpush1.bf16.msra.mxu0 0
        %585 = vmatprep.subr.bf16.mxu0 0
        %586 = vmatpush1.bf16.msra.mxu0 0
        %587 = vmatprep.subr.bf16.mxu0 0
        %588 = vmatpush1.bf16.msra.mxu0 0
        %589 = vmatprep.subr.bf16.mxu0 0
        %590 = vmatpush1.bf16.msra.mxu0 %v571
        %591 = vmatprep.subr.bf16.mxu0 0
        %592 = vmatpush1.bf16.msra.mxu0 %v570
        %593 = vmatprep.subr.bf16.mxu0 0
        %594 = vmatpush2.bf16.msra.mxu0 0
        %595 = vmatprep.subr.bf16.mxu0 0
        %596 = vmatpush2.bf16.msra.mxu0 0
        %597 = vmatprep.subr.bf16.mxu0 0
        %598 = vmatpush2.bf16.msra.mxu0 0
        %599 = vmatprep.subr.bf16.mxu0 0
        %600 = vmatpush2.bf16.msra.mxu0 0
        %601 = vmatprep.subr.bf16.mxu0 0
        %602 = vmatpush2.bf16.msra.mxu0 0
        %603 = vmatprep.subr.bf16.mxu0 0
        %604 = vmatpush2.bf16.msra.mxu0 0
        %605 = vmatprep.subr.bf16.mxu0 0
        %606 = vmatpush2.bf16.msra.mxu0 0
        %607 = vmatprep.subr.bf16.mxu0 0
        %608 = vmatpush2.bf16.msra.mxu0 0
        %609 = vmatprep.mubr.bf16.mxu0 0
        %610 = vmatmul.mubr.bf16.gmra.mxu0 %v575
        %v611 = vpop.f32.mrf.mxu0
        %v612 = vadd.f32 %v560, %v611
        %v613 = vpop.f32.mrf.mxu0
        %v614 = vpop.f32.mrf.mxu0
        %v615 = vadd.f32 %v560, %v614
        %v616 = vpop.f32.mrf.mxu0
        %617 = vdwg.mxu0
        %v618 = vld [vmem:[%s7] sm:$0xf]
        %v619 = vld [vmem:[%s7 + $0x4] sm:$0xf]
        %v620 = vld [vmem:[%s7 + $0x8] sm:$0xf]
        %v621 = vld [vmem:[%s7 + $0xc] sm:$0xf]
        %v626 = vunpack.c.l.b16 %v618
        %v627 = vunpack.c.l.b16 %v619
        %v628 = vunpack.c.l.b16 %v620
        %v629 = vunpack.c.l.b16 %v621
        %v630 = vpack.c.b16 %v627, %v626
        %v631 = vpack.c.b16 %v629, %v628
        %634 = vmatprep.subr.bf16.mxu0 0
        %635 = vmatpush1.bf16.msra.mxu0 0
        %636 = vmatprep.subr.bf16.mxu0 0
        %637 = vmatpush1.bf16.msra.mxu0 0
        %638 = vmatprep.subr.bf16.mxu0 0
        %639 = vmatpush1.bf16.msra.mxu0 0
        %640 = vmatprep.subr.bf16.mxu0 0
        %641 = vmatpush1.bf16.msra.mxu0 0
        %642 = vmatprep.subr.bf16.mxu0 0
        %643 = vmatpush1.bf16.msra.mxu0 0
        %644 = vmatprep.subr.bf16.mxu0 0
        %645 = vmatpush1.bf16.msra.mxu0 0
        %646 = vmatprep.subr.bf16.mxu0 0
        %647 = vmatpush1.bf16.msra.mxu0 %v631
        %648 = vmatprep.subr.bf16.mxu0 0
        %649 = vmatpush1.bf16.msra.mxu0 %v630
        %650 = vmatprep.subr.bf16.mxu0 0
        %651 = vmatpush2.bf16.msra.mxu0 0
        %652 = vmatprep.subr.bf16.mxu0 0
        %653 = vmatpush2.bf16.msra.mxu0 0
        %654 = vmatprep.subr.bf16.mxu0 0
        %655 = vmatpush2.bf16.msra.mxu0 0
        %656 = vmatprep.subr.bf16.mxu0 0
        %657 = vmatpush2.bf16.msra.mxu0 0
        %658 = vmatprep.subr.bf16.mxu0 0
        %659 = vmatpush2.bf16.msra.mxu0 0
        %660 = vmatprep.subr.bf16.mxu0 0
        %661 = vmatpush2.bf16.msra.mxu0 0
        %662 = vmatprep.subr.bf16.mxu0 0
        %663 = vmatpush2.bf16.msra.mxu0 0
        %664 = vmatprep.subr.bf16.mxu0 0
        %665 = vmatpush2.bf16.msra.mxu0 0
        %666 = vmatprep.mubr.bf16.mxu0 0
        %667 = vmatmul.mubr.bf16.gmra.mxu0 %v575
        %v668 = vpop.f32.mrf.mxu0
        %v669 = vadd.f32 0.0, %v668
        %v670 = vpop.f32.mrf.mxu0
        %v671 = vpop.f32.mrf.mxu0
        %v672 = vadd.f32 0.0, %v671
        %v673 = vpop.f32.mrf.mxu0
        %674 = vdwg.mxu0
        %v675 = vpack.c.bf16 %v548, %v545
        %v676 = vpack.c.bf16 %v615, %v612
        %v678 = vlaneseq
        %v679 = vshrl.u32 %v678, 7
        %v680 = vsub.s32 0, %v679
        %v681 = vrot.slane %v482, %v680
        %vm683 = vcmask 64512
        %v685 = vsel %vm683, %v675, 0
        %v688 = vsel %vm683, %v676, 0
        %690 = vmatprep.subr.bf16.mxu0 0
        %691 = vmatpush1.bf16.xpose.msra.mxu0 0
        %692 = vmatprep.subr.bf16.mxu0 0
        %693 = vmatpush1.bf16.xpose.msra.mxu0 0
        %694 = vmatprep.subr.bf16.mxu0 0
        %695 = vmatpush1.bf16.xpose.msra.mxu0 0
        %696 = vmatprep.subr.bf16.mxu0 0
        %697 = vmatpush1.bf16.xpose.msra.mxu0 0
        %698 = vmatprep.subr.bf16.mxu0 0
        %699 = vmatpush1.bf16.xpose.msra.mxu0 0
        %700 = vmatprep.subr.bf16.mxu0 0
        %701 = vmatpush1.bf16.xpose.msra.mxu0 0
        %702 = vmatprep.subr.bf16.mxu0 0
        %703 = vmatpush1.bf16.xpose.msra.mxu0 0
        %704 = vmatprep.subr.bf16.mxu0 0
        %705 = vmatpush1.bf16.xpose.msra.mxu0 %v688
        %706 = vmatprep.subr.bf16.mxu0 0
        %707 = vmatpush2.bf16.xpose.msra.mxu0 0
        %708 = vmatprep.subr.bf16.mxu0 0
        %709 = vmatpush2.bf16.xpose.msra.mxu0 0
        %710 = vmatprep.subr.bf16.mxu0 0
        %711 = vmatpush2.bf16.xpose.msra.mxu0 0
        %712 = vmatprep.subr.bf16.mxu0 0
        %713 = vmatpush2.bf16.xpose.msra.mxu0 0
        %714 = vmatprep.subr.bf16.mxu0 0
        %715 = vmatpush2.bf16.xpose.msra.mxu0 0
        %716 = vmatprep.subr.bf16.mxu0 0
        %717 = vmatpush2.bf16.xpose.msra.mxu0 0
        %718 = vmatprep.subr.bf16.mxu0 0
        %719 = vmatpush2.bf16.xpose.msra.mxu0 0
        %720 = vmatprep.subr.bf16.mxu0 0
        %721 = vmatpush2.bf16.xpose.msra.mxu0 0
        %722 = vmatprep.mubr.bf16.mxu0 0
        %723 = vmatmul.mubr.bf16.gmra.mxu0 %v685
        %v724 = vpop.f32.mrf.mxu0
        %v725 = vadd.f32 %v681, %v724
        %v726 = vpop.f32.mrf.mxu0
        %v727 = vpop.f32.mrf.mxu0
        %v728 = vadd.f32 %v681, %v727
        %v729 = vpop.f32.mrf.mxu0
        %730 = vdwg.mxu0
        %vm731 = vcmask 130048
        %v732 = vsel %vm731, %v725, -inf
        %733 = vmax.xlane.f32.xlu0 %v732
        %v734 = vpop.xlane.xlu0 %733
        %v735 = vsel %vm731, %v728, -inf
        %736 = vmax.xlane.f32.xlu0 %v735
        %v737 = vpop.xlane.xlu0 %736
        %v738 = vsub.f32 %v725, %v734
        %v739 = vsub.f32 %v728, %v737
        %v740 = vmul.f32 %v738, 1.442695
        %v741 = vpow.pop %v740
        %v742 = vmul.f32 %v739, 1.442695
        %v743 = vpow.pop %v742
        %v744 = vsel %vm731, %v741, 0.0
        %745 = vadd.xlane.f32.xlu0 %v744
        %v746 = vpop.xlane.xlu0 %745
        %v747 = vsel %vm731, %v743, 0.0
        %748 = vadd.xlane.f32.xlu0 %v747
        %v749 = vpop.xlane.xlu0 %748
        %v750 = vpack.c.bf16 %v743, %v741
        %v751 = vpack.c.bf16 %v672, %v669
        %v753 = vsel %vm731, %v750, 0
        %755 = vmatprep.subr.bf16.mxu0 0
        %756 = vmatpush1.bf16.msra.mxu0 0
        %757 = vmatprep.subr.bf16.mxu0 0
        %758 = vmatpush1.bf16.msra.mxu0 0
        %759 = vmatprep.subr.bf16.mxu0 0
        %760 = vmatpush1.bf16.msra.mxu0 0
        %761 = vmatprep.subr.bf16.mxu0 0
        %762 = vmatpush1.bf16.msra.mxu0 0
        %763 = vmatprep.subr.bf16.mxu0 0
        %764 = vmatpush1.bf16.msra.mxu0 0
        %765 = vmatprep.subr.bf16.mxu0 0
        %766 = vmatpush1.bf16.msra.mxu0 0
        %767 = vmatprep.subr.bf16.mxu0 0
        %768 = vmatpush1.bf16.msra.mxu0 0
        %769 = vmatprep.subr.bf16.mxu0 0
        %770 = vmatpush1.bf16.msra.mxu0 %v751
        %771 = vmatprep.subr.bf16.mxu0 0
        %772 = vmatpush2.bf16.msra.mxu0 0
        %773 = vmatprep.subr.bf16.mxu0 0
        %774 = vmatpush2.bf16.msra.mxu0 0
        %775 = vmatprep.subr.bf16.mxu0 0
        %776 = vmatpush2.bf16.msra.mxu0 0
        %777 = vmatprep.subr.bf16.mxu0 0
        %778 = vmatpush2.bf16.msra.mxu0 0
        %779 = vmatprep.subr.bf16.mxu0 0
        %780 = vmatpush2.bf16.msra.mxu0 0
        %781 = vmatprep.subr.bf16.mxu0 0
        %782 = vmatpush2.bf16.msra.mxu0 0
        %783 = vmatprep.subr.bf16.mxu0 0
        %784 = vmatpush2.bf16.msra.mxu0 0
        %785 = vmatprep.subr.bf16.mxu0 0
        %786 = vmatpush2.bf16.msra.mxu0 0
        %787 = vmatprep.mubr.bf16.mxu0 0
        %788 = vmatmul.mubr.bf16.gmra.mxu0 %v753
        %v789 = vpop.f32.mrf.mxu0
        %v790 = vadd.f32 0.0, %v789
        %v791 = vpop.f32.mrf.mxu0
        %v792 = vpop.f32.mrf.mxu0
        %v793 = vadd.f32 0.0, %v792
        %v794 = vpop.f32.mrf.mxu0
        %795 = vdwg.mxu0
        %v796 = vrcp.pop %v746
        %v797 = vrcp.pop %v749
        %v798 = vmul.f32 %v790, %v796
        %v799 = vmul.f32 %v793, %v797
        %v800 = vld [vmem:[%s8] sm:$0x1]
        %v802 = vlaneseq
        %v803 = vshrl.u32 %v802, 7
        %v804 = vsub.s32 0, %v803
        %v805 = vrot.slane %v800, %v804
        %v807 = vadd.f32 %v798, %v805
        %v808 = vadd.f32 %v799, %v805
        %v809 = vpack.c.bf16 %v808, %v807
        %v810 = vld [vmem:[%s9] sm:$0xf]
        %s811 = scalar_lea.vmem %s3, 16
        %v812 = vld [vmem:[%s811] sm:$0xf]
        %v813 = vld [vmem:[%s811 + $0x4] sm:$0xf]
        %v814 = vld [vmem:[%s811 + $0x8] sm:$0xf]
        %v815 = vld [vmem:[%s811 + $0xc] sm:$0xf]
        %s816 = scalar_lea.vmem %s4, 1
        %v817 = vld [vmem:[%s816] sm:$0x1]
        %v819 = vlaneseq
        %v820 = vshrl.u32 %v819, 7
        %v821 = vsub.s32 0, %v820
        %v822 = vrot.slane %v817, %v821
        %v828 = vunpack.c.l.b16 %v812
        %v829 = vunpack.c.l.b16 %v813
        %v830 = vunpack.c.l.b16 %v814
        %v831 = vunpack.c.l.b16 %v815
        %v832 = vpack.c.b16 %v829, %v828
        %v833 = vpack.c.b16 %v831, %v830
        %836 = vmatprep.subr.bf16.mxu0 0
        %837 = vmatpush1.bf16.msra.mxu0 0
        %838 = vmatprep.subr.bf16.mxu0 0
        %839 = vmatpush1.bf16.msra.mxu0 0
        %840 = vmatprep.subr.bf16.mxu0 0
        %841 = vmatpush1.bf16.msra.mxu0 0
        %842 = vmatprep.subr.bf16.mxu0 0
        %843 = vmatpush1.bf16.msra.mxu0 0
        %844 = vmatprep.subr.bf16.mxu0 0
        %845 = vmatpush1.bf16.msra.mxu0 0
        %846 = vmatprep.subr.bf16.mxu0 0
        %847 = vmatpush1.bf16.msra.mxu0 0
        %848 = vmatprep.subr.bf16.mxu0 0
        %849 = vmatpush1.bf16.msra.mxu0 %v833
        %850 = vmatprep.subr.bf16.mxu0 0
        %851 = vmatpush1.bf16.msra.mxu0 %v832
        %852 = vmatprep.subr.bf16.mxu0 0
        %853 = vmatpush2.bf16.msra.mxu0 0
        %854 = vmatprep.subr.bf16.mxu0 0
        %855 = vmatpush2.bf16.msra.mxu0 0
        %856 = vmatprep.subr.bf16.mxu0 0
        %857 = vmatpush2.bf16.msra.mxu0 0
        %858 = vmatprep.subr.bf16.mxu0 0
        %859 = vmatpush2.bf16.msra.mxu0 0
        %860 = vmatprep.subr.bf16.mxu0 0
        %861 = vmatpush2.bf16.msra.mxu0 0
        %862 = vmatprep.subr.bf16.mxu0 0
        %863 = vmatpush2.bf16.msra.mxu0 0
        %864 = vmatprep.subr.bf16.mxu0 0
        %865 = vmatpush2.bf16.msra.mxu0 0
        %866 = vmatprep.subr.bf16.mxu0 0
        %867 = vmatpush2.bf16.msra.mxu0 0
        %868 = vmatprep.mubr.bf16.mxu0 0
        %869 = vmatmul.mubr.bf16.gmra.mxu0 %v508
        %v870 = vpop.f32.mrf.mxu0
        %v871 = vadd.f32 %v822, %v870
        %v872 = vpop.f32.mrf.mxu0
        %v873 = vpop.f32.mrf.mxu0
        %v874 = vadd.f32 %v822, %v873
        %v875 = vpop.f32.mrf.mxu0
        %876 = vdwg.mxu0
        %s877 = scalar_lea.vmem %s5, 16
        %v878 = vld [vmem:[%s877] sm:$0xf]
        %v879 = vld [vmem:[%s877 + $0x4] sm:$0xf]
        %v880 = vld [vmem:[%s877 + $0x8] sm:$0xf]
        %v881 = vld [vmem:[%s877 + $0xc] sm:$0xf]
        %s882 = scalar_lea.vmem %s6, 1
        %v883 = vld [vmem:[%s882] sm:$0x1]
        %v885 = vlaneseq
        %v886 = vshrl.u32 %v885, 7
        %v887 = vsub.s32 0, %v886
        %v888 = vrot.slane %v883, %v887
        %v894 = vunpack.c.l.b16 %v878
        %v895 = vunpack.c.l.b16 %v879
        %v896 = vunpack.c.l.b16 %v880
        %v897 = vunpack.c.l.b16 %v881
        %v898 = vpack.c.b16 %v895, %v894
        %v899 = vpack.c.b16 %v897, %v896
        %902 = vmatprep.subr.bf16.mxu0 0
        %903 = vmatpush1.bf16.msra.mxu0 0
        %904 = vmatprep.subr.bf16.mxu0 0
        %905 = vmatpush1.bf16.msra.mxu0 0
        %906 = vmatprep.subr.bf16.mxu0 0
        %907 = vmatpush1.bf16.msra.mxu0 0
        %908 = vmatprep.subr.bf16.mxu0 0
        %909 = vmatpush1.bf16.msra.mxu0 0
        %910 = vmatprep.subr.bf16.mxu0 0
        %911 = vmatpush1.bf16.msra.mxu0 0
        %912 = vmatprep.subr.bf16.mxu0 0
        %913 = vmatpush1.bf16.msra.mxu0 0
        %914 = vmatprep.subr.bf16.mxu0 0
        %915 = vmatpush1.bf16.msra.mxu0 %v899
        %916 = vmatprep.subr.bf16.mxu0 0
        %917 = vmatpush1.bf16.msra.mxu0 %v898
        %918 = vmatprep.subr.bf16.mxu0 0
        %919 = vmatpush2.bf16.msra.mxu0 0
        %920 = vmatprep.subr.bf16.mxu0 0
        %921 = vmatpush2.bf16.msra.mxu0 0
        %922 = vmatprep.subr.bf16.mxu0 0
        %923 = vmatpush2.bf16.msra.mxu0 0
        %924 = vmatprep.subr.bf16.mxu0 0
        %925 = vmatpush2.bf16.msra.mxu0 0
        %926 = vmatprep.subr.bf16.mxu0 0
        %927 = vmatpush2.bf16.msra.mxu0 0
        %928 = vmatprep.subr.bf16.mxu0 0
        %929 = vmatpush2.bf16.msra.mxu0 0
        %930 = vmatprep.subr.bf16.mxu0 0
        %931 = vmatpush2.bf16.msra.mxu0 0
        %932 = vmatprep.subr.bf16.mxu0 0
        %933 = vmatpush2.bf16.msra.mxu0 0
        %934 = vmatprep.mubr.bf16.mxu0 0
        %935 = vmatmul.mubr.bf16.gmra.mxu0 %v575
        %v936 = vpop.f32.mrf.mxu0
        %v937 = vadd.f32 %v888, %v936
        %v938 = vpop.f32.mrf.mxu0
        %v939 = vpop.f32.mrf.mxu0
        %v940 = vadd.f32 %v888, %v939
        %v941 = vpop.f32.mrf.mxu0
        %942 = vdwg.mxu0
        %s943 = scalar_lea.vmem %s7, 16
        %v944 = vld [vmem:[%s943] sm:$0xf]
        %v945 = vld [vmem:[%s943 + $0x4] sm:$0xf]
        %v946 = vld [vmem:[%s943 + $0x8] sm:$0xf]
        %v947 = vld [vmem:[%s943 + $0xc] sm:$0xf]
        %v952 = vunpack.c.l.b16 %v944
        %v953 = vunpack.c.l.b16 %v945
        %v954 = vunpack.c.l.b16 %v946
        %v955 = vunpack.c.l.b16 %v947
        %v956 = vpack.c.b16 %v953, %v952
        %v957 = vpack.c.b16 %v955, %v954
        %960 = vmatprep.subr.bf16.mxu0 0
        %961 = vmatpush1.bf16.msra.mxu0 0
        %962 = vmatprep.subr.bf16.mxu0 0
        %963 = vmatpush1.bf16.msra.mxu0 0
        %964 = vmatprep.subr.bf16.mxu0 0
        %965 = vmatpush1.bf16.msra.mxu0 0
        %966 = vmatprep.subr.bf16.mxu0 0
        %967 = vmatpush1.bf16.msra.mxu0 0
        %968 = vmatprep.subr.bf16.mxu0 0
        %969 = vmatpush1.bf16.msra.mxu0 0
        %970 = vmatprep.subr.bf16.mxu0 0
        %971 = vmatpush1.bf16.msra.mxu0 0
        %972 = vmatprep.subr.bf16.mxu0 0
        %973 = vmatpush1.bf16.msra.mxu0 %v957
        %974 = vmatprep.subr.bf16.mxu0 0
        %975 = vmatpush1.bf16.msra.mxu0 %v956
        %976 = vmatprep.subr.bf16.mxu0 0
        %977 = vmatpush2.bf16.msra.mxu0 0
        %978 = vmatprep.subr.bf16.mxu0 0
        %979 = vmatpush2.bf16.msra.mxu0 0
        %980 = vmatprep.subr.bf16.mxu0 0
        %981 = vmatpush2.bf16.msra.mxu0 0
        %982 = vmatprep.subr.bf16.mxu0 0
        %983 = vmatpush2.bf16.msra.mxu0 0
        %984 = vmatprep.subr.bf16.mxu0 0
        %985 = vmatpush2.bf16.msra.mxu0 0
        %986 = vmatprep.subr.bf16.mxu0 0
        %987 = vmatpush2.bf16.msra.mxu0 0
        %988 = vmatprep.subr.bf16.mxu0 0
        %989 = vmatpush2.bf16.msra.mxu0 0
        %990 = vmatprep.subr.bf16.mxu0 0
        %991 = vmatpush2.bf16.msra.mxu0 0
        %992 = vmatprep.mubr.bf16.mxu0 0
        %993 = vmatmul.mubr.bf16.gmra.mxu0 %v575
        %v994 = vpop.f32.mrf.mxu0
        %v995 = vadd.f32 0.0, %v994
        %v996 = vpop.f32.mrf.mxu0
        %v997 = vpop.f32.mrf.mxu0
        %v998 = vadd.f32 0.0, %v997
        %v999 = vpop.f32.mrf.mxu0
        %1000 = vdwg.mxu0
        %v1001 = vpack.c.bf16 %v874, %v871
        %v1002 = vpack.c.bf16 %v940, %v937
        %v1004 = vsel %vm683, %v1001, 0
        %v1007 = vsel %vm683, %v1002, 0
        %1009 = vmatprep.subr.bf16.mxu0 0
        %1010 = vmatpush1.bf16.xpose.msra.mxu0 0
        %1011 = vmatprep.subr.bf16.mxu0 0
        %1012 = vmatpush1.bf16.xpose.msra.mxu0 0
        %1013 = vmatprep.subr.bf16.mxu0 0
        %1014 = vmatpush1.bf16.xpose.msra.mxu0 0
        %1015 = vmatprep.subr.bf16.mxu0 0
        %1016 = vmatpush1.bf16.xpose.msra.mxu0 0
        %1017 = vmatprep.subr.bf16.mxu0 0
        %1018 = vmatpush1.bf16.xpose.msra.mxu0 0
        %1019 = vmatprep.subr.bf16.mxu0 0
        %1020 = vmatpush1.bf16.xpose.msra.mxu0 0
        %1021 = vmatprep.subr.bf16.mxu0 0
        %1022 = vmatpush1.bf16.xpose.msra.mxu0 0
        %1023 = vmatprep.subr.bf16.mxu0 0
        %1024 = vmatpush1.bf16.xpose.msra.mxu0 %v1007
        %1025 = vmatprep.subr.bf16.mxu0 0
        %1026 = vmatpush2.bf16.xpose.msra.mxu0 0
        %1027 = vmatprep.subr.bf16.mxu0 0
        %1028 = vmatpush2.bf16.xpose.msra.mxu0 0
        %1029 = vmatprep.subr.bf16.mxu0 0
        %1030 = vmatpush2.bf16.xpose.msra.mxu0 0
        %1031 = vmatprep.subr.bf16.mxu0 0
        %1032 = vmatpush2.bf16.xpose.msra.mxu0 0
        %1033 = vmatprep.subr.bf16.mxu0 0
        %1034 = vmatpush2.bf16.xpose.msra.mxu0 0
        %1035 = vmatprep.subr.bf16.mxu0 0
        %1036 = vmatpush2.bf16.xpose.msra.mxu0 0
        %1037 = vmatprep.subr.bf16.mxu0 0
        %1038 = vmatpush2.bf16.xpose.msra.mxu0 0
        %1039 = vmatprep.subr.bf16.mxu0 0
        %1040 = vmatpush2.bf16.xpose.msra.mxu0 0
        %1041 = vmatprep.mubr.bf16.mxu0 0
        %1042 = vmatmul.mubr.bf16.gmra.mxu0 %v1004
        %v1043 = vpop.f32.mrf.mxu0
        %v1044 = vadd.f32 %v681, %v1043
        %v1045 = vpop.f32.mrf.mxu0
        %v1046 = vpop.f32.mrf.mxu0
        %v1047 = vadd.f32 %v681, %v1046
        %v1048 = vpop.f32.mrf.mxu0
        %1049 = vdwg.mxu0
        %v1050 = vsel %vm731, %v1044, -inf
        %1051 = vmax.xlane.f32.xlu0 %v1050
        %v1052 = vpop.xlane.xlu0 %1051
        %v1053 = vsel %vm731, %v1047, -inf
        %1054 = vmax.xlane.f32.xlu0 %v1053
        %v1055 = vpop.xlane.xlu0 %1054
        %v1056 = vsub.f32 %v1044, %v1052
        %v1057 = vsub.f32 %v1047, %v1055
        %v1058 = vmul.f32 %v1056, 1.442695
        %v1059 = vpow.pop %v1058
        %v1060 = vmul.f32 %v1057, 1.442695
        %v1061 = vpow.pop %v1060
        %v1062 = vsel %vm731, %v1059, 0.0
        %1063 = vadd.xlane.f32.xlu0 %v1062
        %v1064 = vpop.xlane.xlu0 %1063
        %v1065 = vsel %vm731, %v1061, 0.0
        %1066 = vadd.xlane.f32.xlu0 %v1065
        %v1067 = vpop.xlane.xlu0 %1066
        %v1068 = vpack.c.bf16 %v1061, %v1059
        %v1069 = vpack.c.bf16 %v998, %v995
        %v1071 = vsel %vm731, %v1068, 0
        %1073 = vmatprep.subr.bf16.mxu0 0
        %1074 = vmatpush1.bf16.msra.mxu0 0
        %1075 = vmatprep.subr.bf16.mxu0 0
        %1076 = vmatpush1.bf16.msra.mxu0 0
        %1077 = vmatprep.subr.bf16.mxu0 0
        %1078 = vmatpush1.bf16.msra.mxu0 0
        %1079 = vmatprep.subr.bf16.mxu0 0
        %1080 = vmatpush1.bf16.msra.mxu0 0
        %1081 = vmatprep.subr.bf16.mxu0 0
        %1082 = vmatpush1.bf16.msra.mxu0 0
        %1083 = vmatprep.subr.bf16.mxu0 0
        %1084 = vmatpush1.bf16.msra.mxu0 0
        %1085 = vmatprep.subr.bf16.mxu0 0
        %1086 = vmatpush1.bf16.msra.mxu0 0
        %1087 = vmatprep.subr.bf16.mxu0 0
        %1088 = vmatpush1.bf16.msra.mxu0 %v1069
        %1089 = vmatprep.subr.bf16.mxu0 0
        %1090 = vmatpush2.bf16.msra.mxu0 0
        %1091 = vmatprep.subr.bf16.mxu0 0
        %1092 = vmatpush2.bf16.msra.mxu0 0
        %1093 = vmatprep.subr.bf16.mxu0 0
        %1094 = vmatpush2.bf16.msra.mxu0 0
        %1095 = vmatprep.subr.bf16.mxu0 0
        %1096 = vmatpush2.bf16.msra.mxu0 0
        %1097 = vmatprep.subr.bf16.mxu0 0
        %1098 = vmatpush2.bf16.msra.mxu0 0
        %1099 = vmatprep.subr.bf16.mxu0 0
        %1100 = vmatpush2.bf16.msra.mxu0 0
        %1101 = vmatprep.subr.bf16.mxu0 0
        %1102 = vmatpush2.bf16.msra.mxu0 0
        %1103 = vmatprep.subr.bf16.mxu0 0
        %1104 = vmatpush2.bf16.msra.mxu0 0
        %1105 = vmatprep.mubr.bf16.mxu0 0
        %1106 = vmatmul.mubr.bf16.gmra.mxu0 %v1071
        %v1107 = vpop.f32.mrf.mxu0
        %v1108 = vadd.f32 0.0, %v1107
        %v1109 = vpop.f32.mrf.mxu0
        %v1110 = vpop.f32.mrf.mxu0
        %v1111 = vadd.f32 0.0, %v1110
        %v1112 = vpop.f32.mrf.mxu0
        %1113 = vdwg.mxu0
        %v1114 = vrcp.pop %v1064
        %v1115 = vrcp.pop %v1067
        %v1116 = vmul.f32 %v1108, %v1114
        %v1117 = vmul.f32 %v1111, %v1115
        %s1118 = scalar_lea.vmem %s8, 1
        %v1119 = vld [vmem:[%s1118] sm:$0x1]
        %v1121 = vlaneseq
        %v1122 = vshrl.u32 %v1121, 7
        %v1123 = vsub.s32 0, %v1122
        %v1124 = vrot.slane %v1119, %v1123
        %v1126 = vadd.f32 %v1116, %v1124
        %v1127 = vadd.f32 %v1117, %v1124
        %v1128 = vpack.c.bf16 %v1127, %v1126
        %s1129 = scalar_lea.vmem %s9, 4
        %v1130 = vld [vmem:[%s1129] sm:$0xf]
        %v1132 = vsel %vm683, %v1128, 0
        %vm1134 = vcmask 1043456
        %v1136 = vsel %vm1134, %v1130, 0
        %1138 = vmatprep.subr.bf16.mxu0 0
        %1139 = vmatpush1.bf16.msra.mxu0 0
        %1140 = vmatprep.subr.bf16.mxu0 0
        %1141 = vmatpush1.bf16.msra.mxu0 0
        %1142 = vmatprep.subr.bf16.mxu0 0
        %1143 = vmatpush1.bf16.msra.mxu0 0
        %1144 = vmatprep.subr.bf16.mxu0 0
        %1145 = vmatpush1.bf16.msra.mxu0 0
        %1146 = vmatprep.subr.bf16.mxu0 0
        %1147 = vmatpush1.bf16.msra.mxu0 0
        %1148 = vmatprep.subr.bf16.mxu0 0
        %1149 = vmatpush1.bf16.msra.mxu0 0
        %1150 = vmatprep.subr.bf16.mxu0 0
        %1151 = vmatpush1.bf16.msra.mxu0 0
        %1152 = vmatprep.subr.bf16.mxu0 0
        %1153 = vmatpush1.bf16.msra.mxu0 %v1136
        %1154 = vmatprep.subr.bf16.mxu0 0
        %1155 = vmatpush2.bf16.msra.mxu0 0
        %1156 = vmatprep.subr.bf16.mxu0 0
        %1157 = vmatpush2.bf16.msra.mxu0 0
        %1158 = vmatprep.subr.bf16.mxu0 0
        %1159 = vmatpush2.bf16.msra.mxu0 0
        %1160 = vmatprep.subr.bf16.mxu0 0
        %1161 = vmatpush2.bf16.msra.mxu0 0
        %1162 = vmatprep.subr.bf16.mxu0 0
        %1163 = vmatpush2.bf16.msra.mxu0 0
        %1164 = vmatprep.subr.bf16.mxu0 0
        %1165 = vmatpush2.bf16.msra.mxu0 0
        %1166 = vmatprep.subr.bf16.mxu0 0
        %1167 = vmatpush2.bf16.msra.mxu0 0
        %1168 = vmatprep.subr.bf16.mxu0 0
        %1169 = vmatpush2.bf16.msra.mxu0 0
        %1170 = vmatprep.mubr.bf16.mxu0 0
        %1171 = vmatmul.mubr.bf16.gmra.mxu0 %v1132
        %v1172 = vpop.f32.mrf.mxu0
        %v1173 = vadd.f32 0.0, %v1172
        %v1174 = vpop.f32.mrf.mxu0
        %v1175 = vpop.f32.mrf.mxu0
        %v1176 = vadd.f32 0.0, %v1175
        %v1177 = vpop.f32.mrf.mxu0
        %1178 = vdwg.mxu0
        %v1180 = vsel %vm683, %v809, 0
        %v1183 = vsel %vm1134, %v810, 0
        %1185 = vmatprep.subr.bf16.mxu0 0
        %1186 = vmatpush1.bf16.msra.mxu0 0
        %1187 = vmatprep.subr.bf16.mxu0 0
        %1188 = vmatpush1.bf16.msra.mxu0 0
        %1189 = vmatprep.subr.bf16.mxu0 0
        %1190 = vmatpush1.bf16.msra.mxu0 0
        %1191 = vmatprep.subr.bf16.mxu0 0
        %1192 = vmatpush1.bf16.msra.mxu0 0
        %1193 = vmatprep.subr.bf16.mxu0 0
        %1194 = vmatpush1.bf16.msra.mxu0 0
        %1195 = vmatprep.subr.bf16.mxu0 0
        %1196 = vmatpush1.bf16.msra.mxu0 0
        %1197 = vmatprep.subr.bf16.mxu0 0
        %1198 = vmatpush1.bf16.msra.mxu0 0
        %1199 = vmatprep.subr.bf16.mxu0 0
        %1200 = vmatpush1.bf16.msra.mxu0 %v1183
        %1201 = vmatprep.subr.bf16.mxu0 0
        %1202 = vmatpush2.bf16.msra.mxu0 0
        %1203 = vmatprep.subr.bf16.mxu0 0
        %1204 = vmatpush2.bf16.msra.mxu0 0
        %1205 = vmatprep.subr.bf16.mxu0 0
        %1206 = vmatpush2.bf16.msra.mxu0 0
        %1207 = vmatprep.subr.bf16.mxu0 0
        %1208 = vmatpush2.bf16.msra.mxu0 0
        %1209 = vmatprep.subr.bf16.mxu0 0
        %1210 = vmatpush2.bf16.msra.mxu0 0
        %1211 = vmatprep.subr.bf16.mxu0 0
        %1212 = vmatpush2.bf16.msra.mxu0 0
        %1213 = vmatprep.subr.bf16.mxu0 0
        %1214 = vmatpush2.bf16.msra.mxu0 0
        %1215 = vmatprep.subr.bf16.mxu0 0
        %1216 = vmatpush2.bf16.msra.mxu0 0
        %1217 = vmatprep.mubr.bf16.mxu0 0
        %1218 = vmatmul.mubr.bf16.gmra.mxu0 %v1180
        %v1219 = vpop.f32.mrf.mxu0
        %v1220 = vadd.f32 %v1173, %v1219
        %v1221 = vpop.f32.mrf.mxu0
        %v1222 = vpop.f32.mrf.mxu0
        %v1223 = vadd.f32 %v1176, %v1222
        %v1224 = vpop.f32.mrf.mxu0
        %1225 = vdwg.mxu0
        %s1226 = scalar_lea.vmem %s3, 32
        %v1227 = vld [vmem:[%s1226] sm:$0xf]
        %v1228 = vld [vmem:[%s1226 + $0x4] sm:$0xf]
        %v1229 = vld [vmem:[%s1226 + $0x8] sm:$0xf]
        %v1230 = vld [vmem:[%s1226 + $0xc] sm:$0xf]
        %s1231 = scalar_lea.vmem %s4, 2
        %v1232 = vld [vmem:[%s1231] sm:$0x1]
        %v1234 = vlaneseq
        %v1235 = vshrl.u32 %v1234, 7
        %v1236 = vsub.s32 0, %v1235
        %v1237 = vrot.slane %v1232, %v1236
        %v1243 = vunpack.c.l.b16 %v1227
        %v1244 = vunpack.c.l.b16 %v1228
        %v1245 = vunpack.c.l.b16 %v1229
        %v1246 = vunpack.c.l.b16 %v1230
        %v1247 = vpack.c.b16 %v1244, %v1243
        %v1248 = vpack.c.b16 %v1246, %v1245
        %1251 = vmatprep.subr.bf16.mxu0 0
        %1252 = vmatpush1.bf16.msra.mxu0 0
        %1253 = vmatprep.subr.bf16.mxu0 0
        %1254 = vmatpush1.bf16.msra.mxu0 0
        %1255 = vmatprep.subr.bf16.mxu0 0
        %1256 = vmatpush1.bf16.msra.mxu0 0
        %1257 = vmatprep.subr.bf16.mxu0 0
        %1258 = vmatpush1.bf16.msra.mxu0 0
        %1259 = vmatprep.subr.bf16.mxu0 0
        %1260 = vmatpush1.bf16.msra.mxu0 0
        %1261 = vmatprep.subr.bf16.mxu0 0
        %1262 = vmatpush1.bf16.msra.mxu0 0
        %1263 = vmatprep.subr.bf16.mxu0 0
        %1264 = vmatpush1.bf16.msra.mxu0 %v1248
        %1265 = vmatprep.subr.bf16.mxu0 0
        %1266 = vmatpush1.bf16.msra.mxu0 %v1247
        %1267 = vmatprep.subr.bf16.mxu0 0
        %1268 = vmatpush2.bf16.msra.mxu0 0
        %1269 = vmatprep.subr.bf16.mxu0 0
        %1270 = vmatpush2.bf16.msra.mxu0 0
        %1271 = vmatprep.subr.bf16.mxu0 0
        %1272 = vmatpush2.bf16.msra.mxu0 0
        %1273 = vmatprep.subr.bf16.mxu0 0
        %1274 = vmatpush2.bf16.msra.mxu0 0
        %1275 = vmatprep.subr.bf16.mxu0 0
        %1276 = vmatpush2.bf16.msra.mxu0 0
        %1277 = vmatprep.subr.bf16.mxu0 0
        %1278 = vmatpush2.bf16.msra.mxu0 0
        %1279 = vmatprep.subr.bf16.mxu0 0
        %1280 = vmatpush2.bf16.msra.mxu0 0
        %1281 = vmatprep.subr.bf16.mxu0 0
        %1282 = vmatpush2.bf16.msra.mxu0 0
        %1283 = vmatprep.mubr.bf16.mxu0 0
        %1284 = vmatmul.mubr.bf16.gmra.mxu0 %v508
        %v1285 = vpop.f32.mrf.mxu0
        %v1286 = vadd.f32 %v1237, %v1285
        %v1287 = vpop.f32.mrf.mxu0
        %v1288 = vpop.f32.mrf.mxu0
        %v1289 = vadd.f32 %v1237, %v1288
        %v1290 = vpop.f32.mrf.mxu0
        %1291 = vdwg.mxu0
        %s1292 = scalar_lea.vmem %s5, 32
        %v1293 = vld [vmem:[%s1292] sm:$0xf]
        %v1294 = vld [vmem:[%s1292 + $0x4] sm:$0xf]
        %v1295 = vld [vmem:[%s1292 + $0x8] sm:$0xf]
        %v1296 = vld [vmem:[%s1292 + $0xc] sm:$0xf]
        %s1297 = scalar_lea.vmem %s6, 2
        %v1298 = vld [vmem:[%s1297] sm:$0x1]
        %v1300 = vlaneseq
        %v1301 = vshrl.u32 %v1300, 7
        %v1302 = vsub.s32 0, %v1301
        %v1303 = vrot.slane %v1298, %v1302
        %v1309 = vunpack.c.l.b16 %v1293
        %v1310 = vunpack.c.l.b16 %v1294
        %v1311 = vunpack.c.l.b16 %v1295
        %v1312 = vunpack.c.l.b16 %v1296
        %v1313 = vpack.c.b16 %v1310, %v1309
        %v1314 = vpack.c.b16 %v1312, %v1311
        %1317 = vmatprep.subr.bf16.mxu0 0
        %1318 = vmatpush1.bf16.msra.mxu0 0
        %1319 = vmatprep.subr.bf16.mxu0 0
        %1320 = vmatpush1.bf16.msra.mxu0 0
        %1321 = vmatprep.subr.bf16.mxu0 0
        %1322 = vmatpush1.bf16.msra.mxu0 0
        %1323 = vmatprep.subr.bf16.mxu0 0
        %1324 = vmatpush1.bf16.msra.mxu0 0
        %1325 = vmatprep.subr.bf16.mxu0 0
        %1326 = vmatpush1.bf16.msra.mxu0 0
        %1327 = vmatprep.subr.bf16.mxu0 0
        %1328 = vmatpush1.bf16.msra.mxu0 0
        %1329 = vmatprep.subr.bf16.mxu0 0
        %1330 = vmatpush1.bf16.msra.mxu0 %v1314
        %1331 = vmatprep.subr.bf16.mxu0 0
        %1332 = vmatpush1.bf16.msra.mxu0 %v1313
        %1333 = vmatprep.subr.bf16.mxu0 0
        %1334 = vmatpush2.bf16.msra.mxu0 0
        %1335 = vmatprep.subr.bf16.mxu0 0
        %1336 = vmatpush2.bf16.msra.mxu0 0
        %1337 = vmatprep.subr.bf16.mxu0 0
        %1338 = vmatpush2.bf16.msra.mxu0 0
        %1339 = vmatprep.subr.bf16.mxu0 0
        %1340 = vmatpush2.bf16.msra.mxu0 0
        %1341 = vmatprep.subr.bf16.mxu0 0
        %1342 = vmatpush2.bf16.msra.mxu0 0
        %1343 = vmatprep.subr.bf16.mxu0 0
        %1344 = vmatpush2.bf16.msra.mxu0 0
        %1345 = vmatprep.subr.bf16.mxu0 0
        %1346 = vmatpush2.bf16.msra.mxu0 0
        %1347 = vmatprep.subr.bf16.mxu0 0
        %1348 = vmatpush2.bf16.msra.mxu0 0
        %1349 = vmatprep.mubr.bf16.mxu0 0
        %1350 = vmatmul.mubr.bf16.gmra.mxu0 %v575
        %v1351 = vpop.f32.mrf.mxu0
        %v1352 = vadd.f32 %v1303, %v1351
        %v1353 = vpop.f32.mrf.mxu0
        %v1354 = vpop.f32.mrf.mxu0
        %v1355 = vadd.f32 %v1303, %v1354
        %v1356 = vpop.f32.mrf.mxu0
        %1357 = vdwg.mxu0
        %s1358 = scalar_lea.vmem %s7, 32
        %v1359 = vld [vmem:[%s1358] sm:$0xf]
        %v1360 = vld [vmem:[%s1358 + $0x4] sm:$0xf]
        %v1361 = vld [vmem:[%s1358 + $0x8] sm:$0xf]
        %v1362 = vld [vmem:[%s1358 + $0xc] sm:$0xf]
        %v1367 = vunpack.c.l.b16 %v1359
        %v1368 = vunpack.c.l.b16 %v1360
        %v1369 = vunpack.c.l.b16 %v1361
        %v1370 = vunpack.c.l.b16 %v1362
        %v1371 = vpack.c.b16 %v1368, %v1367
        %v1372 = vpack.c.b16 %v1370, %v1369
        %1375 = vmatprep.subr.bf16.mxu0 0
        %1376 = vmatpush1.bf16.msra.mxu0 0
        %1377 = vmatprep.subr.bf16.mxu0 0
        %1378 = vmatpush1.bf16.msra.mxu0 0
        %1379 = vmatprep.subr.bf16.mxu0 0
        %1380 = vmatpush1.bf16.msra.mxu0 0
        %1381 = vmatprep.subr.bf16.mxu0 0
        %1382 = vmatpush1.bf16.msra.mxu0 0
        %1383 = vmatprep.subr.bf16.mxu0 0
        %1384 = vmatpush1.bf16.msra.mxu0 0
        %1385 = vmatprep.subr.bf16.mxu0 0
        %1386 = vmatpush1.bf16.msra.mxu0 0
        %1387 = vmatprep.subr.bf16.mxu0 0
        %1388 = vmatpush1.bf16.msra.mxu0 %v1372
        %1389 = vmatprep.subr.bf16.mxu0 0
        %1390 = vmatpush1.bf16.msra.mxu0 %v1371
        %1391 = vmatprep.subr.bf16.mxu0 0
        %1392 = vmatpush2.bf16.msra.mxu0 0
        %1393 = vmatprep.subr.bf16.mxu0 0
        %1394 = vmatpush2.bf16.msra.mxu0 0
        %1395 = vmatprep.subr.bf16.mxu0 0
        %1396 = vmatpush2.bf16.msra.mxu0 0
        %1397 = vmatprep.subr.bf16.mxu0 0
        %1398 = vmatpush2.bf16.msra.mxu0 0
        %1399 = vmatprep.subr.bf16.mxu0 0
        %1400 = vmatpush2.bf16.msra.mxu0 0
        %1401 = vmatprep.subr.bf16.mxu0 0
        %1402 = vmatpush2.bf16.msra.mxu0 0
        %1403 = vmatprep.subr.bf16.mxu0 0
        %1404 = vmatpush2.bf16.msra.mxu0 0
        %1405 = vmatprep.subr.bf16.mxu0 0
        %1406 = vmatpush2.bf16.msra.mxu0 0
        %1407 = vmatprep.mubr.bf16.mxu0 0
        %1408 = vmatmul.mubr.bf16.gmra.mxu0 %v575
        %v1409 = vpop.f32.mrf.mxu0
        %v1410 = vadd.f32 0.0, %v1409
        %v1411 = vpop.f32.mrf.mxu0
        %v1412 = vpop.f32.mrf.mxu0
        %v1413 = vadd.f32 0.0, %v1412
        %v1414 = vpop.f32.mrf.mxu0
        %1415 = vdwg.mxu0
        %v1416 = vpack.c.bf16 %v1289, %v1286
        %v1417 = vpack.c.bf16 %v1355, %v1352
        %v1419 = vsel %vm683, %v1416, 0
        %v1422 = vsel %vm683, %v1417, 0
        %1424 = vmatprep.subr.bf16.mxu0 0
        %1425 = vmatpush1.bf16.xpose.msra.mxu0 0
        %1426 = vmatprep.subr.bf16.mxu0 0
        %1427 = vmatpush1.bf16.xpose.msra.mxu0 0
        %1428 = vmatprep.subr.bf16.mxu0 0
        %1429 = vmatpush1.bf16.xpose.msra.mxu0 0
        %1430 = vmatprep.subr.bf16.mxu0 0
        %1431 = vmatpush1.bf16.xpose.msra.mxu0 0
        %1432 = vmatprep.subr.bf16.mxu0 0
        %1433 = vmatpush1.bf16.xpose.msra.mxu0 0
        %1434 = vmatprep.subr.bf16.mxu0 0
        %1435 = vmatpush1.bf16.xpose.msra.mxu0 0
        %1436 = vmatprep.subr.bf16.mxu0 0
        %1437 = vmatpush1.bf16.xpose.msra.mxu0 0
        %1438 = vmatprep.subr.bf16.mxu0 0
        %1439 = vmatpush1.bf16.xpose.msra.mxu0 %v1422
        %1440 = vmatprep.subr.bf16.mxu0 0
        %1441 = vmatpush2.bf16.xpose.msra.mxu0 0
        %1442 = vmatprep.subr.bf16.mxu0 0
        %1443 = vmatpush2.bf16.xpose.msra.mxu0 0
        %1444 = vmatprep.subr.bf16.mxu0 0
        %1445 = vmatpush2.bf16.xpose.msra.mxu0 0
        %1446 = vmatprep.subr.bf16.mxu0 0
        %1447 = vmatpush2.bf16.xpose.msra.mxu0 0
        %1448 = vmatprep.subr.bf16.mxu0 0
        %1449 = vmatpush2.bf16.xpose.msra.mxu0 0
        %1450 = vmatprep.subr.bf16.mxu0 0
        %1451 = vmatpush2.bf16.xpose.msra.mxu0 0
        %1452 = vmatprep.subr.bf16.mxu0 0
        %1453 = vmatpush2.bf16.xpose.msra.mxu0 0
        %1454 = vmatprep.subr.bf16.mxu0 0
        %1455 = vmatpush2.bf16.xpose.msra.mxu0 0
        %1456 = vmatprep.mubr.bf16.mxu0 0
        %1457 = vmatmul.mubr.bf16.gmra.mxu0 %v1419
        %v1458 = vpop.f32.mrf.mxu0
        %v1459 = vadd.f32 %v681, %v1458
        %v1460 = vpop.f32.mrf.mxu0
        %v1461 = vpop.f32.mrf.mxu0
        %v1462 = vadd.f32 %v681, %v1461
        %v1463 = vpop.f32.mrf.mxu0
        %1464 = vdwg.mxu0
        %v1465 = vsel %vm731, %v1459, -inf
        %1466 = vmax.xlane.f32.xlu0 %v1465
        %v1467 = vpop.xlane.xlu0 %1466
        %v1468 = vsel %vm731, %v1462, -inf
        %1469 = vmax.xlane.f32.xlu0 %v1468
        %v1470 = vpop.xlane.xlu0 %1469
        %v1471 = vsub.f32 %v1459, %v1467
        %v1472 = vsub.f32 %v1462, %v1470
        %v1473 = vmul.f32 %v1471, 1.442695
        %v1474 = vpow.pop %v1473
        %v1475 = vmul.f32 %v1472, 1.442695
        %v1476 = vpow.pop %v1475
        %v1477 = vsel %vm731, %v1474, 0.0
        %1478 = vadd.xlane.f32.xlu0 %v1477
        %v1479 = vpop.xlane.xlu0 %1478
        %v1480 = vsel %vm731, %v1476, 0.0
        %1481 = vadd.xlane.f32.xlu0 %v1480
        %v1482 = vpop.xlane.xlu0 %1481
        %v1483 = vpack.c.bf16 %v1476, %v1474
        %v1484 = vpack.c.bf16 %v1413, %v1410
        %v1486 = vsel %vm731, %v1483, 0
        %1488 = vmatprep.subr.bf16.mxu0 0
        %1489 = vmatpush1.bf16.msra.mxu0 0
        %1490 = vmatprep.subr.bf16.mxu0 0
        %1491 = vmatpush1.bf16.msra.mxu0 0
        %1492 = vmatprep.subr.bf16.mxu0 0
        %1493 = vmatpush1.bf16.msra.mxu0 0
        %1494 = vmatprep.subr.bf16.mxu0 0
        %1495 = vmatpush1.bf16.msra.mxu0 0
        %1496 = vmatprep.subr.bf16.mxu0 0
        %1497 = vmatpush1.bf16.msra.mxu0 0
        %1498 = vmatprep.subr.bf16.mxu0 0
        %1499 = vmatpush1.bf16.msra.mxu0 0
        %1500 = vmatprep.subr.bf16.mxu0 0
        %1501 = vmatpush1.bf16.msra.mxu0 0
        %1502 = vmatprep.subr.bf16.mxu0 0
        %1503 = vmatpush1.bf16.msra.mxu0 %v1484
        %1504 = vmatprep.subr.bf16.mxu0 0
        %1505 = vmatpush2.bf16.msra.mxu0 0
        %1506 = vmatprep.subr.bf16.mxu0 0
        %1507 = vmatpush2.bf16.msra.mxu0 0
        %1508 = vmatprep.subr.bf16.mxu0 0
        %1509 = vmatpush2.bf16.msra.mxu0 0
        %1510 = vmatprep.subr.bf16.mxu0 0
        %1511 = vmatpush2.bf16.msra.mxu0 0
        %1512 = vmatprep.subr.bf16.mxu0 0
        %1513 = vmatpush2.bf16.msra.mxu0 0
        %1514 = vmatprep.subr.bf16.mxu0 0
        %1515 = vmatpush2.bf16.msra.mxu0 0
        %1516 = vmatprep.subr.bf16.mxu0 0
        %1517 = vmatpush2.bf16.msra.mxu0 0
        %1518 = vmatprep.subr.bf16.mxu0 0
        %1519 = vmatpush2.bf16.msra.mxu0 0
        %1520 = vmatprep.mubr.bf16.mxu0 0
        %1521 = vmatmul.mubr.bf16.gmra.mxu0 %v1486
        %v1522 = vpop.f32.mrf.mxu0
        %v1523 = vadd.f32 0.0, %v1522
        %v1524 = vpop.f32.mrf.mxu0
        %v1525 = vpop.f32.mrf.mxu0
        %v1526 = vadd.f32 0.0, %v1525
        %v1527 = vpop.f32.mrf.mxu0
        %1528 = vdwg.mxu0
        %v1529 = vrcp.pop %v1479
        %v1530 = vrcp.pop %v1482
        %v1531 = vmul.f32 %v1523, %v1529
        %v1532 = vmul.f32 %v1526, %v1530
        %s1533 = scalar_lea.vmem %s8, 2
        %v1534 = vld [vmem:[%s1533] sm:$0x1]
        %v1536 = vlaneseq
        %v1537 = vshrl.u32 %v1536, 7
        %v1538 = vsub.s32 0, %v1537
        %v1539 = vrot.slane %v1534, %v1538
        %v1541 = vadd.f32 %v1531, %v1539
        %v1542 = vadd.f32 %v1532, %v1539
        %v1543 = vpack.c.bf16 %v1542, %v1541
        %s1544 = scalar_lea.vmem %s9, 8
        %v1545 = vld [vmem:[%s1544] sm:$0xf]
        %v1547 = vsel %vm683, %v1543, 0
        %v1550 = vsel %vm1134, %v1545, 0
        %1552 = vmatprep.subr.bf16.mxu0 0
        %1553 = vmatpush1.bf16.msra.mxu0 0
        %1554 = vmatprep.subr.bf16.mxu0 0
        %1555 = vmatpush1.bf16.msra.mxu0 0
        %1556 = vmatprep.subr.bf16.mxu0 0
        %1557 = vmatpush1.bf16.msra.mxu0 0
        %1558 = vmatprep.subr.bf16.mxu0 0
        %1559 = vmatpush1.bf16.msra.mxu0 0
        %1560 = vmatprep.subr.bf16.mxu0 0
        %1561 = vmatpush1.bf16.msra.mxu0 0
        %1562 = vmatprep.subr.bf16.mxu0 0
        %1563 = vmatpush1.bf16.msra.mxu0 0
        %1564 = vmatprep.subr.bf16.mxu0 0
        %1565 = vmatpush1.bf16.msra.mxu0 0
        %1566 = vmatprep.subr.bf16.mxu0 0
        %1567 = vmatpush1.bf16.msra.mxu0 %v1550
        %1568 = vmatprep.subr.bf16.mxu0 0
        %1569 = vmatpush2.bf16.msra.mxu0 0
        %1570 = vmatprep.subr.bf16.mxu0 0
        %1571 = vmatpush2.bf16.msra.mxu0 0
        %1572 = vmatprep.subr.bf16.mxu0 0
        %1573 = vmatpush2.bf16.msra.mxu0 0
        %1574 = vmatprep.subr.bf16.mxu0 0
        %1575 = vmatpush2.bf16.msra.mxu0 0
        %1576 = vmatprep.subr.bf16.mxu0 0
        %1577 = vmatpush2.bf16.msra.mxu0 0
        %1578 = vmatprep.subr.bf16.mxu0 0
        %1579 = vmatpush2.bf16.msra.mxu0 0
        %1580 = vmatprep.subr.bf16.mxu0 0
        %1581 = vmatpush2.bf16.msra.mxu0 0
        %1582 = vmatprep.subr.bf16.mxu0 0
        %1583 = vmatpush2.bf16.msra.mxu0 0
        %1584 = vmatprep.mubr.bf16.mxu0 0
        %1585 = vmatmul.mubr.bf16.gmra.mxu0 %v1547
        %v1586 = vpop.f32.mrf.mxu0
        %v1587 = vadd.f32 0.0, %v1586
        %v1588 = vpop.f32.mrf.mxu0
        %v1589 = vpop.f32.mrf.mxu0
        %v1590 = vadd.f32 0.0, %v1589
        %v1591 = vpop.f32.mrf.mxu0
        %1592 = vdwg.mxu0
        %v1593 = vadd.f32 %v1220, %v1587
        %v1594 = vadd.f32 %v1223, %v1590
        %s1595 = scalar_lea.vmem %s3, 48
        %v1596 = vld [vmem:[%s1595] sm:$0xf]
        %v1597 = vld [vmem:[%s1595 + $0x4] sm:$0xf]
        %v1598 = vld [vmem:[%s1595 + $0x8] sm:$0xf]
        %v1599 = vld [vmem:[%s1595 + $0xc] sm:$0xf]
        %s1600 = scalar_lea.vmem %s4, 3
        %v1601 = vld [vmem:[%s1600] sm:$0x1]
        %v1603 = vlaneseq
        %v1604 = vshrl.u32 %v1603, 7
        %v1605 = vsub.s32 0, %v1604
        %v1606 = vrot.slane %v1601, %v1605
        %v1612 = vunpack.c.l.b16 %v1596
        %v1613 = vunpack.c.l.b16 %v1597
        %v1614 = vunpack.c.l.b16 %v1598
        %v1615 = vunpack.c.l.b16 %v1599
        %v1616 = vpack.c.b16 %v1613, %v1612
        %v1617 = vpack.c.b16 %v1615, %v1614
        %1620 = vmatprep.subr.bf16.mxu0 0
        %1621 = vmatpush1.bf16.msra.mxu0 0
        %1622 = vmatprep.subr.bf16.mxu0 0
        %1623 = vmatpush1.bf16.msra.mxu0 0
        %1624 = vmatprep.subr.bf16.mxu0 0
        %1625 = vmatpush1.bf16.msra.mxu0 0
        %1626 = vmatprep.subr.bf16.mxu0 0
        %1627 = vmatpush1.bf16.msra.mxu0 0
        %1628 = vmatprep.subr.bf16.mxu0 0
        %1629 = vmatpush1.bf16.msra.mxu0 0
        %1630 = vmatprep.subr.bf16.mxu0 0
        %1631 = vmatpush1.bf16.msra.mxu0 0
        %1632 = vmatprep.subr.bf16.mxu0 0
        %1633 = vmatpush1.bf16.msra.mxu0 %v1617
        %1634 = vmatprep.subr.bf16.mxu0 0
        %1635 = vmatpush1.bf16.msra.mxu0 %v1616
        %1636 = vmatprep.subr.bf16.mxu0 0
        %1637 = vmatpush2.bf16.msra.mxu0 0
        %1638 = vmatprep.subr.bf16.mxu0 0
        %1639 = vmatpush2.bf16.msra.mxu0 0
        %1640 = vmatprep.subr.bf16.mxu0 0
        %1641 = vmatpush2.bf16.msra.mxu0 0
        %1642 = vmatprep.subr.bf16.mxu0 0
        %1643 = vmatpush2.bf16.msra.mxu0 0
        %1644 = vmatprep.subr.bf16.mxu0 0
        %1645 = vmatpush2.bf16.msra.mxu0 0
        %1646 = vmatprep.subr.bf16.mxu0 0
        %1647 = vmatpush2.bf16.msra.mxu0 0
        %1648 = vmatprep.subr.bf16.mxu0 0
        %1649 = vmatpush2.bf16.msra.mxu0 0
        %1650 = vmatprep.subr.bf16.mxu0 0
        %1651 = vmatpush2.bf16.msra.mxu0 0
        %1652 = vmatprep.mubr.bf16.mxu0 0
        %1653 = vmatmul.mubr.bf16.gmra.mxu0 %v508
        %v1654 = vpop.f32.mrf.mxu0
        %v1655 = vadd.f32 %v1606, %v1654
        %v1656 = vpop.f32.mrf.mxu0
        %v1657 = vpop.f32.mrf.mxu0
        %v1658 = vadd.f32 %v1606, %v1657
        %v1659 = vpop.f32.mrf.mxu0
        %1660 = vdwg.mxu0
        %s1661 = scalar_lea.vmem %s5, 48
        %v1662 = vld [vmem:[%s1661] sm:$0xf]
        %v1663 = vld [vmem:[%s1661 + $0x4] sm:$0xf]
        %v1664 = vld [vmem:[%s1661 + $0x8] sm:$0xf]
        %v1665 = vld [vmem:[%s1661 + $0xc] sm:$0xf]
        %s1666 = scalar_lea.vmem %s6, 3
        %v1667 = vld [vmem:[%s1666] sm:$0x1]
        %v1669 = vlaneseq
        %v1670 = vshrl.u32 %v1669, 7
        %v1671 = vsub.s32 0, %v1670
        %v1672 = vrot.slane %v1667, %v1671
        %v1678 = vunpack.c.l.b16 %v1662
        %v1679 = vunpack.c.l.b16 %v1663
        %v1680 = vunpack.c.l.b16 %v1664
        %v1681 = vunpack.c.l.b16 %v1665
        %v1682 = vpack.c.b16 %v1679, %v1678
        %v1683 = vpack.c.b16 %v1681, %v1680
        %1686 = vmatprep.subr.bf16.mxu0 0
        %1687 = vmatpush1.bf16.msra.mxu0 0
        %1688 = vmatprep.subr.bf16.mxu0 0
        %1689 = vmatpush1.bf16.msra.mxu0 0
        %1690 = vmatprep.subr.bf16.mxu0 0
        %1691 = vmatpush1.bf16.msra.mxu0 0
        %1692 = vmatprep.subr.bf16.mxu0 0
        %1693 = vmatpush1.bf16.msra.mxu0 0
        %1694 = vmatprep.subr.bf16.mxu0 0
        %1695 = vmatpush1.bf16.msra.mxu0 0
        %1696 = vmatprep.subr.bf16.mxu0 0
        %1697 = vmatpush1.bf16.msra.mxu0 0
        %1698 = vmatprep.subr.bf16.mxu0 0
        %1699 = vmatpush1.bf16.msra.mxu0 %v1683
        %1700 = vmatprep.subr.bf16.mxu0 0
        %1701 = vmatpush1.bf16.msra.mxu0 %v1682
        %1702 = vmatprep.subr.bf16.mxu0 0
        %1703 = vmatpush2.bf16.msra.mxu0 0
        %1704 = vmatprep.subr.bf16.mxu0 0
        %1705 = vmatpush2.bf16.msra.mxu0 0
        %1706 = vmatprep.subr.bf16.mxu0 0
        %1707 = vmatpush2.bf16.msra.mxu0 0
        %1708 = vmatprep.subr.bf16.mxu0 0
        %1709 = vmatpush2.bf16.msra.mxu0 0
        %1710 = vmatprep.subr.bf16.mxu0 0
        %1711 = vmatpush2.bf16.msra.mxu0 0
        %1712 = vmatprep.subr.bf16.mxu0 0
        %1713 = vmatpush2.bf16.msra.mxu0 0
        %1714 = vmatprep.subr.bf16.mxu0 0
        %1715 = vmatpush2.bf16.msra.mxu0 0
        %1716 = vmatprep.subr.bf16.mxu0 0
        %1717 = vmatpush2.bf16.msra.mxu0 0
        %1718 = vmatprep.mubr.bf16.mxu0 0
        %1719 = vmatmul.mubr.bf16.gmra.mxu0 %v575
        %v1720 = vpop.f32.mrf.mxu0
        %v1721 = vadd.f32 %v1672, %v1720
        %v1722 = vpop.f32.mrf.mxu0
        %v1723 = vpop.f32.mrf.mxu0
        %v1724 = vadd.f32 %v1672, %v1723
        %v1725 = vpop.f32.mrf.mxu0
        %1726 = vdwg.mxu0
        %s1727 = scalar_lea.vmem %s7, 48
        %v1728 = vld [vmem:[%s1727] sm:$0xf]
        %v1729 = vld [vmem:[%s1727 + $0x4] sm:$0xf]
        %v1730 = vld [vmem:[%s1727 + $0x8] sm:$0xf]
        %v1731 = vld [vmem:[%s1727 + $0xc] sm:$0xf]
        %v1736 = vunpack.c.l.b16 %v1728
        %v1737 = vunpack.c.l.b16 %v1729
        %v1738 = vunpack.c.l.b16 %v1730
        %v1739 = vunpack.c.l.b16 %v1731
        %v1740 = vpack.c.b16 %v1737, %v1736
        %v1741 = vpack.c.b16 %v1739, %v1738
        %1744 = vmatprep.subr.bf16.mxu0 0
        %1745 = vmatpush1.bf16.msra.mxu0 0
        %1746 = vmatprep.subr.bf16.mxu0 0
        %1747 = vmatpush1.bf16.msra.mxu0 0
        %1748 = vmatprep.subr.bf16.mxu0 0
        %1749 = vmatpush1.bf16.msra.mxu0 0
        %1750 = vmatprep.subr.bf16.mxu0 0
        %1751 = vmatpush1.bf16.msra.mxu0 0
        %1752 = vmatprep.subr.bf16.mxu0 0
        %1753 = vmatpush1.bf16.msra.mxu0 0
        %1754 = vmatprep.subr.bf16.mxu0 0
        %1755 = vmatpush1.bf16.msra.mxu0 0
        %1756 = vmatprep.subr.bf16.mxu0 0
        %1757 = vmatpush1.bf16.msra.mxu0 %v1741
        %1758 = vmatprep.subr.bf16.mxu0 0
        %1759 = vmatpush1.bf16.msra.mxu0 %v1740
        %1760 = vmatprep.subr.bf16.mxu0 0
        %1761 = vmatpush2.bf16.msra.mxu0 0
        %1762 = vmatprep.subr.bf16.mxu0 0
        %1763 = vmatpush2.bf16.msra.mxu0 0
        %1764 = vmatprep.subr.bf16.mxu0 0
        %1765 = vmatpush2.bf16.msra.mxu0 0
        %1766 = vmatprep.subr.bf16.mxu0 0
        %1767 = vmatpush2.bf16.msra.mxu0 0
        %1768 = vmatprep.subr.bf16.mxu0 0
        %1769 = vmatpush2.bf16.msra.mxu0 0
        %1770 = vmatprep.subr.bf16.mxu0 0
        %1771 = vmatpush2.bf16.msra.mxu0 0
        %1772 = vmatprep.subr.bf16.mxu0 0
        %1773 = vmatpush2.bf16.msra.mxu0 0
        %1774 = vmatprep.subr.bf16.mxu0 0
        %1775 = vmatpush2.bf16.msra.mxu0 0
        %1776 = vmatprep.mubr.bf16.mxu0 0
        %1777 = vmatmul.mubr.bf16.gmra.mxu0 %v575
        %v1778 = vpop.f32.mrf.mxu0
        %v1779 = vadd.f32 0.0, %v1778
        %v1780 = vpop.f32.mrf.mxu0
        %v1781 = vpop.f32.mrf.mxu0
        %v1782 = vadd.f32 0.0, %v1781
        %v1783 = vpop.f32.mrf.mxu0
        %1784 = vdwg.mxu0
        %v1785 = vpack.c.bf16 %v1658, %v1655
        %v1786 = vpack.c.bf16 %v1724, %v1721
        %v1788 = vsel %vm683, %v1785, 0
        %v1791 = vsel %vm683, %v1786, 0
        %1793 = vmatprep.subr.bf16.mxu0 0
        %1794 = vmatpush1.bf16.xpose.msra.mxu0 0
        %1795 = vmatprep.subr.bf16.mxu0 0
        %1796 = vmatpush1.bf16.xpose.msra.mxu0 0
        %1797 = vmatprep.subr.bf16.mxu0 0
        %1798 = vmatpush1.bf16.xpose.msra.mxu0 0
        %1799 = vmatprep.subr.bf16.mxu0 0
        %1800 = vmatpush1.bf16.xpose.msra.mxu0 0
        %1801 = vmatprep.subr.bf16.mxu0 0
        %1802 = vmatpush1.bf16.xpose.msra.mxu0 0
        %1803 = vmatprep.subr.bf16.mxu0 0
        %1804 = vmatpush1.bf16.xpose.msra.mxu0 0
        %1805 = vmatprep.subr.bf16.mxu0 0
        %1806 = vmatpush1.bf16.xpose.msra.mxu0 0
        %1807 = vmatprep.subr.bf16.mxu0 0
        %1808 = vmatpush1.bf16.xpose.msra.mxu0 %v1791
        %1809 = vmatprep.subr.bf16.mxu0 0
        %1810 = vmatpush2.bf16.xpose.msra.mxu0 0
        %1811 = vmatprep.subr.bf16.mxu0 0
        %1812 = vmatpush2.bf16.xpose.msra.mxu0 0
        %1813 = vmatprep.subr.bf16.mxu0 0
        %1814 = vmatpush2.bf16.xpose.msra.mxu0 0
        %1815 = vmatprep.subr.bf16.mxu0 0
        %1816 = vmatpush2.bf16.xpose.msra.mxu0 0
        %1817 = vmatprep.subr.bf16.mxu0 0
        %1818 = vmatpush2.bf16.xpose.msra.mxu0 0
        %1819 = vmatprep.subr.bf16.mxu0 0
        %1820 = vmatpush2.bf16.xpose.msra.mxu0 0
        %1821 = vmatprep.subr.bf16.mxu0 0
        %1822 = vmatpush2.bf16.xpose.msra.mxu0 0
        %1823 = vmatprep.subr.bf16.mxu0 0
        %1824 = vmatpush2.bf16.xpose.msra.mxu0 0
        %1825 = vmatprep.mubr.bf16.mxu0 0
        %1826 = vmatmul.mubr.bf16.gmra.mxu0 %v1788
        %v1827 = vpop.f32.mrf.mxu0
        %v1828 = vadd.f32 %v681, %v1827
        %v1829 = vpop.f32.mrf.mxu0
        %v1830 = vpop.f32.mrf.mxu0
        %v1831 = vadd.f32 %v681, %v1830
        %v1832 = vpop.f32.mrf.mxu0
        %1833 = vdwg.mxu0
        %v1834 = vsel %vm731, %v1828, -inf
        %1835 = vmax.xlane.f32.xlu0 %v1834
        %v1836 = vpop.xlane.xlu0 %1835
        %v1837 = vsel %vm731, %v1831, -inf
        %1838 = vmax.xlane.f32.xlu0 %v1837
        %v1839 = vpop.xlane.xlu0 %1838
        %v1840 = vsub.f32 %v1828, %v1836
        %v1841 = vsub.f32 %v1831, %v1839
        %v1842 = vmul.f32 %v1840, 1.442695
        %v1843 = vpow.pop %v1842
        %v1844 = vmul.f32 %v1841, 1.442695
        %v1845 = vpow.pop %v1844
        %v1846 = vsel %vm731, %v1843, 0.0
        %1847 = vadd.xlane.f32.xlu0 %v1846
        %v1848 = vpop.xlane.xlu0 %1847
        %v1849 = vsel %vm731, %v1845, 0.0
        %1850 = vadd.xlane.f32.xlu0 %v1849
        %v1851 = vpop.xlane.xlu0 %1850
        %v1852 = vpack.c.bf16 %v1845, %v1843
        %v1853 = vpack.c.bf16 %v1782, %v1779
        %v1855 = vsel %vm731, %v1852, 0
        %1857 = vmatprep.subr.bf16.mxu0 0
        %1858 = vmatpush1.bf16.msra.mxu0 0
        %1859 = vmatprep.subr.bf16.mxu0 0
        %1860 = vmatpush1.bf16.msra.mxu0 0
        %1861 = vmatprep.subr.bf16.mxu0 0
        %1862 = vmatpush1.bf16.msra.mxu0 0
        %1863 = vmatprep.subr.bf16.mxu0 0
        %1864 = vmatpush1.bf16.msra.mxu0 0
        %1865 = vmatprep.subr.bf16.mxu0 0
        %1866 = vmatpush1.bf16.msra.mxu0 0
        %1867 = vmatprep.subr.bf16.mxu0 0
        %1868 = vmatpush1.bf16.msra.mxu0 0
        %1869 = vmatprep.subr.bf16.mxu0 0
        %1870 = vmatpush1.bf16.msra.mxu0 0
        %1871 = vmatprep.subr.bf16.mxu0 0
        %1872 = vmatpush1.bf16.msra.mxu0 %v1853
        %1873 = vmatprep.subr.bf16.mxu0 0
        %1874 = vmatpush2.bf16.msra.mxu0 0
        %1875 = vmatprep.subr.bf16.mxu0 0
        %1876 = vmatpush2.bf16.msra.mxu0 0
        %1877 = vmatprep.subr.bf16.mxu0 0
        %1878 = vmatpush2.bf16.msra.mxu0 0
        %1879 = vmatprep.subr.bf16.mxu0 0
        %1880 = vmatpush2.bf16.msra.mxu0 0
        %1881 = vmatprep.subr.bf16.mxu0 0
        %1882 = vmatpush2.bf16.msra.mxu0 0
        %1883 = vmatprep.subr.bf16.mxu0 0
        %1884 = vmatpush2.bf16.msra.mxu0 0
        %1885 = vmatprep.subr.bf16.mxu0 0
        %1886 = vmatpush2.bf16.msra.mxu0 0
        %1887 = vmatprep.subr.bf16.mxu0 0
        %1888 = vmatpush2.bf16.msra.mxu0 0
        %1889 = vmatprep.mubr.bf16.mxu0 0
        %1890 = vmatmul.mubr.bf16.gmra.mxu0 %v1855
        %v1891 = vpop.f32.mrf.mxu0
        %v1892 = vadd.f32 0.0, %v1891
        %v1893 = vpop.f32.mrf.mxu0
        %v1894 = vpop.f32.mrf.mxu0
        %v1895 = vadd.f32 0.0, %v1894
        %v1896 = vpop.f32.mrf.mxu0
        %1897 = vdwg.mxu0
        %v1898 = vrcp.pop %v1848
        %v1899 = vrcp.pop %v1851
        %v1900 = vmul.f32 %v1892, %v1898
        %v1901 = vmul.f32 %v1895, %v1899
        %s1902 = scalar_lea.vmem %s8, 3
        %v1903 = vld [vmem:[%s1902] sm:$0x1]
        %v1905 = vlaneseq
        %v1906 = vshrl.u32 %v1905, 7
        %v1907 = vsub.s32 0, %v1906
        %v1908 = vrot.slane %v1903, %v1907
        %v1910 = vadd.f32 %v1900, %v1908
        %v1911 = vadd.f32 %v1901, %v1908
        %v1912 = vpack.c.bf16 %v1911, %v1910
        %s1913 = scalar_lea.vmem %s9, 12
        %v1914 = vld [vmem:[%s1913] sm:$0xf]
        %v1916 = vsel %vm683, %v1912, 0
        %v1919 = vsel %vm1134, %v1914, 0
        %1921 = vmatprep.subr.bf16.mxu0 0
        %1922 = vmatpush1.bf16.msra.mxu0 0
        %1923 = vmatprep.subr.bf16.mxu0 0
        %1924 = vmatpush1.bf16.msra.mxu0 0
        %1925 = vmatprep.subr.bf16.mxu0 0
        %1926 = vmatpush1.bf16.msra.mxu0 0
        %1927 = vmatprep.subr.bf16.mxu0 0
        %1928 = vmatpush1.bf16.msra.mxu0 0
        %1929 = vmatprep.subr.bf16.mxu0 0
        %1930 = vmatpush1.bf16.msra.mxu0 0
        %1931 = vmatprep.subr.bf16.mxu0 0
        %1932 = vmatpush1.bf16.msra.mxu0 0
        %1933 = vmatprep.subr.bf16.mxu0 0
        %1934 = vmatpush1.bf16.msra.mxu0 0
        %1935 = vmatprep.subr.bf16.mxu0 0
        %1936 = vmatpush1.bf16.msra.mxu0 %v1919
        %1937 = vmatprep.subr.bf16.mxu0 0
        %1938 = vmatpush2.bf16.msra.mxu0 0
        %1939 = vmatprep.subr.bf16.mxu0 0
        %1940 = vmatpush2.bf16.msra.mxu0 0
        %1941 = vmatprep.subr.bf16.mxu0 0
        %1942 = vmatpush2.bf16.msra.mxu0 0
        %1943 = vmatprep.subr.bf16.mxu0 0
        %1944 = vmatpush2.bf16.msra.mxu0 0
        %1945 = vmatprep.subr.bf16.mxu0 0
        %1946 = vmatpush2.bf16.msra.mxu0 0
        %1947 = vmatprep.subr.bf16.mxu0 0
        %1948 = vmatpush2.bf16.msra.mxu0 0
        %1949 = vmatprep.subr.bf16.mxu0 0
        %1950 = vmatpush2.bf16.msra.mxu0 0
        %1951 = vmatprep.subr.bf16.mxu0 0
        %1952 = vmatpush2.bf16.msra.mxu0 0
        %1953 = vmatprep.mubr.bf16.mxu0 0
        %1954 = vmatmul.mubr.bf16.gmra.mxu0 %v1916
        %v1955 = vpop.f32.mrf.mxu0
        %v1956 = vadd.f32 0.0, %v1955
        %v1957 = vpop.f32.mrf.mxu0
        %v1958 = vpop.f32.mrf.mxu0
        %v1959 = vadd.f32 0.0, %v1958
        %v1960 = vpop.f32.mrf.mxu0
        %1961 = vdwg.mxu0
        %v1962 = vadd.f32 %v1593, %v1956
        %v1963 = vadd.f32 %v1594, %v1959
        %v1964 = vld [vmem:[%s10] sm:$0x1]
        %v1966 = vlaneseq
        %v1967 = vshrl.u32 %v1966, 7
        %v1968 = vsub.s32 0, %v1967
        %v1969 = vrot.slane %v1964, %v1968
        %v1971 = vadd.f32 %v1962, %v1969
        %v1972 = vadd.f32 %v1963, %v1969
        %v1973 = vadd.f32 %v1971, %v474
        %v1974 = vadd.f32 %v1972, %v475
        %v1975 = vsel %vm506, %v1973, 0.0
        %1976 = vadd.xlane.f32.xlu0 %v1975
        %v1977 = vpop.xlane.xlu0 %1976
        %v1978 = vsel %vm506, %v1974, 0.0
        %1979 = vadd.xlane.f32.xlu0 %v1978
        %v1980 = vpop.xlane.xlu0 %1979
        %v1981 = vrcp.pop 32.0
        %v1982 = vmul.f32 %v1977, %v1981
        %v1983 = vmul.f32 %v1980, %v1981
        %v1984 = vsub.f32 %v1973, %v1982
        %v1985 = vsub.f32 %v1974, %v1983
        %v1986 = vmul.f32 %v1984, %v1984
        %v1987 = vmul.f32 %v1985, %v1985
        %v1988 = vsel %vm506, %v1986, 0.0
        %1989 = vadd.xlane.f32.xlu0 %v1988
        %v1990 = vpop.xlane.xlu0 %1989
        %v1991 = vsel %vm506, %v1987, 0.0
        %1992 = vadd.xlane.f32.xlu0 %v1991
        %v1993 = vpop.xlane.xlu0 %1992
        %v1994 = vmul.f32 %v1990, %v1981
        %v1995 = vmul.f32 %v1993, %v1981
        %v1996 = vadd.f32 %v1994, 1e-12
        %v1997 = vadd.f32 %v1995, 1e-12
        %v1998 = vrsqrt.pop %v1996
        %v1999 = vrsqrt.pop %v1997
        %v2000 = vmul.f32 %v1984, %v1998
        %v2001 = vmul.f32 %v1985, %v1999
        %v2002 = vld [vmem:[%s11] sm:$0x1]
        %v2004 = vlaneseq
        %v2005 = vshrl.u32 %v2004, 7
        %v2006 = vsub.s32 0, %v2005
        %v2007 = vrot.slane %v2002, %v2006
        %v2009 = vmul.f32 %v2000, %v2007
        %v2010 = vmul.f32 %v2001, %v2007
        %v2011 = vld [vmem:[%s12] sm:$0x1]
        %v2013 = vlaneseq
        %v2014 = vshrl.u32 %v2013, 7
        %v2015 = vsub.s32 0, %v2014
        %v2016 = vrot.slane %v2011, %v2015
        %v2018 = vadd.f32 %v2009, %v2016
        %v2019 = vadd.f32 %v2010, %v2016
        %2020 = vst.msk [vmem:[%s459] sm:$0xff] %vm506, %v2018
        %2021 = vst.msk [vmem:[%s459 + $0x8] sm:$0xff] %vm506, %v2019
        %s2022 = sand.u32 %s323, 1
        %s2023 = scalar_lea.sflag [#allocation3], %s2022
        %s2024 = sand.u32 %s323, 1
        %s2025 = smul.addr %s2024, 16
        %s2026 = scalar_lea.vmem [#allocation2], %s2025
        // Predicated region
        $region73: #{tpu_custom_call.1} parent=71 // pred_check
          %p2027 = pneg %p333
        $region74: #{tpu_custom_call.1} parent=71 // pred_check_branch
          %2029 = sbr.rel (%p2027) target = $region76
        $region75: #{tpu_custom_call.1} parent=71 // pred_region
          %s2031 = ssub.s32 256, 256
          %2032 = vsyncadd %s2023, %s2031
          %s2033 = smul.addr %s27, 2
          %s2034 = smul.addr %s2033, 128
          %s2035 = scalar_lea.hbm %s13, %s2034
          %s2036 = sshll.u32 %s2026, 4
          %s2037 = int_to_ptr.vmem [resolvable:$true] %s2036
          %2042 = dma.vmem_to_hbm [thread:$0]  %s2037, 256, %s2035, %s2023, 128, 128, 8
        $region76: #{tpu_custom_call.1} parent=71 // pred_fallthru
          _
      $region72: #{tpu_custom_call.1} parent=5 // pred_fallthru
        _
      %p2043 = scmp.le.s32.totalorder 2, %s22
      // Predicated region
      $region77: #{tpu_custom_call.1} parent=5 // pred_check
        %p2044 = pneg %p2043
      $region78: #{tpu_custom_call.1} parent=5 // pred_check_branch
        %2046 = sbr.rel (%p2044) target = $region80
      $region79: #{tpu_custom_call.1} parent=5 // pred_region
        %s2047 = ssub.s32 %s22, 2
        // Predicated region
        $region81: #{tpu_custom_call.1} parent=79 // pred_check
          %p2048 = pneg %p339
        $region82: #{tpu_custom_call.1} parent=79 // pred_check_branch
          %2050 = sbr.rel (%p2048) target = $region84
        $region83: #{tpu_custom_call.1} parent=79 // pred_region
          %s2051 = sand.u32 %s324, 1
          %s2052 = scalar_lea.sflag [#allocation3], %s2051
          %s2053 = sand.u32 %s324, 1
          %s2054 = smul.addr %s2053, 16
          %s2055 = scalar_lea.vmem [#allocation2], %s2054
          %2056 = dma.done %s2052, 256
        $region84: #{tpu_custom_call.1} parent=79 // pred_fallthru
          _
      $region80: #{tpu_custom_call.1} parent=5 // pred_fallthru
        _
    $region6: #{tpu_custom_call.1} parent=1 // loop_footer
      %s26 = sadd.s32 1, %s22
    $region7: #{tpu_custom_call.1} parent=1 // loop_footer_branch
      %21 = sbr.rel target = $region3
    $region8: #{tpu_custom_call.1} parent=1 // loop_exit
      _
    %2057 = vsyncpa [#allocation3], 1
    %s2058 = scalar_lea.sflag [#allocation3], 1
    %2059 = vsyncpa %s2058, 1

</llo_original>
